<compile_context>
chip_gen: v7x
topology: tpu7x:2x2x1
jax: 0.10.0
libtpu: 0.0.40
codegen_flags: <defaults>
</compile_context>

<pallas_src>
import functools

import jax
import jax.numpy as jnp
from jax.experimental import pallas as pl
from jax.experimental.pallas import tpu as pltpu


_D_IN = 3
_HIDDEN = 64
_D_OUT = 2
_D_OUT_PAD = 8          # pad 2 -> 8 output rows: whole-sublane result tiles
_LANE = 128
_MAX_TILE_M = 16384     # (64, 16384) f32 intermediates are 4 MiB each -> safe
                        # under the explicit 48 MiB VMEM limit on every gen.


def _pinn_kernel(x_ref,
                 w1_ref, b1_ref,
                 w2_ref, b2_ref,
                 w3_ref, b3_ref,
                 w4_ref, b4_ref,
                 o_ref, *, matmul_dtype, precision):
    """Fused 4-layer MLP forward for one batch tile, feature-major layout.

    x_ref: (3, TM)    w1: (64, 3)   b1: (64, 1)
    hidden: (64, TM)  w2/w3: (64, 64), b2/b3: (64, 1)
    o_ref: (8, TM)    w4: (8, 64) (rows 2..7 zero), b4: (8, 1)
    """
    x = x_ref[...]                                   # (3, TM) f32
    w1 = w1_ref[...]                                 # (64, 3)

    # Layer 1: K=3 is a degenerate MXU shape -> 3 VPU broadcast-FMAs instead.
    h = (w1[:, 0:1] * x[0:1, :]
         + w1[:, 1:2] * x[1:2, :]
         + w1[:, 2:3] * x[2:3, :]
         + b1_ref[...])                              # (64, TM)
    h = jnp.tanh(h)                                  # single EUP op / element

    # Layer 2: (64,64) @ (64,TM) on the MXU, lane-dense N = TM.
    # Default: bf16 inputs / f32 accumulation.  Strict path: f32 inputs with
    # precision=HIGHEST (fp32 contraction).
    h = jnp.dot(w2_ref[...].astype(matmul_dtype), h.astype(matmul_dtype),
                preferred_element_type=jnp.float32,
                precision=precision) + b2_ref[...]
    h = jnp.tanh(h)

    # Layer 3
    h = jnp.dot(w3_ref[...].astype(matmul_dtype), h.astype(matmul_dtype),
                preferred_element_type=jnp.float32,
                precision=precision) + b3_ref[...]
    h = jnp.tanh(h)

    # Layer 4 (padded to 8 rows): (8,64) @ (64,TM) -> (8,TM); the output
    # store is whole-sublane and lane-dense (unmasked vst).
    out = jnp.dot(w4_ref[...].astype(matmul_dtype), h.astype(matmul_dtype),
                  preferred_element_type=jnp.float32,
                  precision=precision) + b4_ref[...]
    o_ref[...] = out.astype(o_ref.dtype)


def _round_up(v, m):
    return ((v + m - 1) // m) * m


def _choose_tile(n, tile_m):
    """Batch-tile (lane-dim) selection: multiple of 128, VMEM-safe, and
    leaving >= 2 grid steps when possible so the "parallel" axis can split
    across both v7x TensorCores."""
    tile_m = _round_up(max(int(tile_m), _LANE), _LANE)   # round BEFORE clamping
    tile_m = min(tile_m, _MAX_TILE_M)
    n_ceil = _round_up(n, _LANE)
    tile_m = min(tile_m, n_ceil)
    if n_ceil >= 2 * _LANE:
        tile_m = min(tile_m, max(_LANE, (n_ceil // 2) // _LANE * _LANE))
    n_pad = _round_up(n, tile_m)
    return tile_m, n_pad


def pinn_forward_fm(x_fm, params, *, tile_m=8192, matmul_dtype=jnp.bfloat16):
    """Feature-major entry point: x_fm (3, N) -> (2, N).

    Keeping the batch on the lane axis end-to-end avoids the extra HBM
    transpose passes required by the (N,3)/(N,2) PyTorch layout.
    """
    (w1, b1), (w2, b2), (w3, b3), (w4, b4) = params
    d_in, n = x_fm.shape
    assert d_in == _D_IN
    assert w4.shape[0] == _D_OUT

    # Pad the 2-row output layer to 8 rows (rows 2..7 are zero).
    w4p = jnp.zeros((_D_OUT_PAD, w4.shape[1]), w4.dtype).at[:_D_OUT].set(w4)
    b4p = jnp.zeros((_D_OUT_PAD, 1), b4.dtype).at[:_D_OUT].set(b4)

    tile_m, n_pad = _choose_tile(n, tile_m)
    x_pad = x_fm if n_pad == n else jnp.pad(x_fm, ((0, 0), (0, n_pad - n)))

    grid = (n_pad // tile_m,)

    strict_f32 = jnp.dtype(matmul_dtype) == jnp.dtype(jnp.float32)
    precision = jax.lax.Precision.HIGHEST if strict_f32 else None

    def full(arr):
        # Whole array, same block every grid step -> fetched once, no re-DMA.
        return pl.BlockSpec(arr.shape, lambda i: (0, 0))

    flops_per_pt = 2 * (_HIDDEN * _D_IN + 2 * _HIDDEN * _HIDDEN
                        + _D_OUT_PAD * _HIDDEN)
    cost = pl.CostEstimate(
        flops=flops_per_pt * n_pad,
        transcendentals=3 * _HIDDEN * n_pad,
        bytes_accessed=(_D_IN + _D_OUT_PAD) * 4 * n_pad
        + sum(int(a.size) * 4 for p in params for a in p),
    )

    kernel = functools.partial(_pinn_kernel,
                               matmul_dtype=matmul_dtype,
                               precision=precision)

    out_fm = pl.pallas_call(
        kernel,
        out_shape=jax.ShapeDtypeStruct((_D_OUT_PAD, n_pad), jnp.float32),
        grid_spec=pltpu.PrefetchScalarGridSpec(
            num_scalar_prefetch=0,
            grid=grid,
            in_specs=[
                pl.BlockSpec((_D_IN, tile_m), lambda i: (0, i)),   # x tile
                full(w1), full(b1),
                full(w2), full(b2),
                full(w3), full(b3),
                full(w4p), full(b4p),
            ],
            out_specs=pl.BlockSpec((_D_OUT_PAD, tile_m), lambda i: (0, i)),
        ),
        compiler_params=pltpu.CompilerParams(
            dimension_semantics=("parallel",),
            vmem_limit_bytes=48 * 1024 * 1024,
        ),
        cost_estimate=cost,
    )(x_pad, w1, b1, w2, b2, w3, b3, w4p, b4p)

    # Slice off padded output rows / padded batch points.
    return out_fm[:_D_OUT, :n]


def pinn_forward(x, params, *, tile_m=8192, matmul_dtype=jnp.bfloat16):
    """PyTorch-layout convenience wrapper: x (N, 3) -> (N, 2).

    For fused pipelines prefer `pinn_forward_fm` and keep arrays feature-major
    so the two transpose passes below disappear entirely.
    """
    out_fm = pinn_forward_fm(x.T, params, tile_m=tile_m,
                             matmul_dtype=matmul_dtype)
    return out_fm.T


def init_params(key):
    """Deterministic init mimicking PyTorch nn.Linear defaults:
    U(-1/sqrt(fan_in), 1/sqrt(fan_in)) for weight and bias.
    Weights in PyTorch (out, in) layout; biases as (out, 1)."""
    dims = [(3, 64), (64, 64), (64, 64), (64, 2)]
    params = []
    for fan_in, fan_out in dims:
        key, kw, kb = jax.random.split(key, 3)
        bound = 1.0 / jnp.sqrt(jnp.float32(fan_in))
        w = jax.random.uniform(kw, (fan_out, fan_in), jnp.float32, -bound, bound)
        b = jax.random.uniform(kb, (fan_out, 1), jnp.float32, -bound, bound)
        params.append((w, b))
    return params


def pinn_ref(x, params):
    """Plain-JAX reference (PyTorch semantics), full-f32 matmuls."""
    (w1, b1), (w2, b2), (w3, b3), (w4, b4) = params
    hp = jax.lax.Precision.HIGHEST
    h = jnp.tanh(jnp.dot(x, w1.T, precision=hp) + b1.T)
    h = jnp.tanh(jnp.dot(h, w2.T, precision=hp) + b2.T)
    h = jnp.tanh(jnp.dot(h, w3.T, precision=hp) + b3.T)
    return jnp.dot(h, w4.T, precision=hp) + b4.T


if __name__ == "__main__":
    key = jax.random.PRNGKey(0)
    kx, kp = jax.random.split(key)

    # Small deterministic input: 256 collocation points, 3 coords (x, y, t).
    n = 256
    x = jax.random.normal(kx, (n, _D_IN), dtype=jnp.float32)
    params = init_params(kp)
    ref = pinn_ref(x, params)

    # 1) Strict-precision path: f32 MXU inputs with fp32 contraction.
    out_f32 = jax.block_until_ready(
        pinn_forward(x, params, matmul_dtype=jnp.float32))
    assert out_f32.shape == (n, _D_OUT), out_f32.shape
    assert jnp.allclose(out_f32, ref, atol=1e-4, rtol=1e-4), (
        float(jnp.max(jnp.abs(out_f32 - ref))))

    # 2) Default fast path: bf16 MXU inputs, f32 accumulation.
    out_bf16 = jax.block_until_ready(pinn_forward(x, params))
    assert out_bf16.shape == (n, _D_OUT), out_bf16.shape
    assert jnp.allclose(out_bf16, ref, atol=2e-2, rtol=2e-2), (
        float(jnp.max(jnp.abs(out_bf16 - ref))))

    # 3) Feature-major entry point (no wrapper transposes), ragged N.
    n2 = 200
    x2 = jax.random.normal(jax.random.PRNGKey(1), (_D_IN, n2), dtype=jnp.float32)
    out_fm = jax.block_until_ready(
        pinn_forward_fm(x2, params, matmul_dtype=jnp.float32))
    assert out_fm.shape == (_D_OUT, n2), out_fm.shape
    ref2 = pinn_ref(x2.T, params)
    assert jnp.allclose(out_fm.T, ref2, atol=1e-4, rtol=1e-4), (
        float(jnp.max(jnp.abs(out_fm.T - ref2))))

    print("KERNEL_OK")
</pallas_src>

<mosaic_0001>
module attributes {stable_mosaic.version = 11 : i64} {
  func.func @_pinn_kernel(%arg0: i32, %arg1: memref<3x128xf32, #tpu.memory_space<vmem>>, %arg2: memref<64x3xf32, #tpu.memory_space<vmem>>, %arg3: memref<64x1xf32, #tpu.memory_space<vmem>>, %arg4: memref<64x64xf32, #tpu.memory_space<vmem>>, %arg5: memref<64x1xf32, #tpu.memory_space<vmem>>, %arg6: memref<64x64xf32, #tpu.memory_space<vmem>>, %arg7: memref<64x1xf32, #tpu.memory_space<vmem>>, %arg8: memref<8x64xf32, #tpu.memory_space<vmem>>, %arg9: memref<8x1xf32, #tpu.memory_space<vmem>>, %arg10: memref<8x128xf32, #tpu.memory_space<vmem>>) attributes {dimension_semantics = [#tpu.dimension_semantics<parallel>], iteration_bounds = array<i64: 2>, scalar_prefetch = 0 : i64, scratch_operands = 0 : i64, tpu.core_type = #tpu.core_type<tc>, window_params = [{transform_indices = @transform_0, window_bounds = array<i64: 3, 128>}, {pipeline_mode = #tpu.pipeline_mode<synchronous>, transform_indices = @transform_1, window_bounds = array<i64: 64, 3>}, {pipeline_mode = #tpu.pipeline_mode<synchronous>, transform_indices = @transform_2, window_bounds = array<i64: 64, 1>}, {pipeline_mode = #tpu.pipeline_mode<synchronous>, transform_indices = @transform_3, window_bounds = array<i64: 64, 64>}, {pipeline_mode = #tpu.pipeline_mode<synchronous>, transform_indices = @transform_4, window_bounds = array<i64: 64, 1>}, {pipeline_mode = #tpu.pipeline_mode<synchronous>, transform_indices = @transform_5, window_bounds = array<i64: 64, 64>}, {pipeline_mode = #tpu.pipeline_mode<synchronous>, transform_indices = @transform_6, window_bounds = array<i64: 64, 1>}, {pipeline_mode = #tpu.pipeline_mode<synchronous>, transform_indices = @transform_7, window_bounds = array<i64: 8, 64>}, {pipeline_mode = #tpu.pipeline_mode<synchronous>, transform_indices = @transform_8, window_bounds = array<i64: 8, 1>}, {transform_indices = @transform_9, window_bounds = array<i64: 8, 128>}]} {
    %c0 = arith.constant 0 : index
    %c0_0 = arith.constant 0 : index
    %0 = vector.load %arg1[%c0, %c0_0] : memref<3x128xf32, #tpu.memory_space<vmem>>, vector<3x128xf32>
    %c0_1 = arith.constant 0 : index
    %c0_2 = arith.constant 0 : index
    %1 = vector.load %arg2[%c0_1, %c0_2] : memref<64x3xf32, #tpu.memory_space<vmem>>, vector<64x3xf32>
    %2 = vector.extract_strided_slice %1 {offsets = [0, 0], sizes = [64, 1], strides = [1, 1]} : vector<64x3xf32> to vector<64x1xf32>
    %3 = vector.extract_strided_slice %0 {offsets = [0, 0], sizes = [1, 128], strides = [1, 1]} : vector<3x128xf32> to vector<1x128xf32>
    %4 = vector.broadcast %2 : vector<64x1xf32> to vector<64x128xf32>
    %5 = vector.broadcast %3 : vector<1x128xf32> to vector<64x128xf32>
    %6 = arith.mulf %4, %5 : vector<64x128xf32>
    %7 = vector.extract_strided_slice %1 {offsets = [0, 1], sizes = [64, 1], strides = [1, 1]} : vector<64x3xf32> to vector<64x1xf32>
    %8 = vector.extract_strided_slice %0 {offsets = [1, 0], sizes = [1, 128], strides = [1, 1]} : vector<3x128xf32> to vector<1x128xf32>
    %9 = vector.broadcast %7 : vector<64x1xf32> to vector<64x128xf32>
    %10 = vector.broadcast %8 : vector<1x128xf32> to vector<64x128xf32>
    %11 = arith.mulf %9, %10 : vector<64x128xf32>
    %12 = arith.addf %6, %11 : vector<64x128xf32>
    %13 = vector.extract_strided_slice %1 {offsets = [0, 2], sizes = [64, 1], strides = [1, 1]} : vector<64x3xf32> to vector<64x1xf32>
    %14 = vector.extract_strided_slice %0 {offsets = [2, 0], sizes = [1, 128], strides = [1, 1]} : vector<3x128xf32> to vector<1x128xf32>
    %15 = vector.broadcast %13 : vector<64x1xf32> to vector<64x128xf32>
    %16 = vector.broadcast %14 : vector<1x128xf32> to vector<64x128xf32>
    %17 = arith.mulf %15, %16 : vector<64x128xf32>
    %18 = arith.addf %12, %17 : vector<64x128xf32>
    %c0_3 = arith.constant 0 : index
    %c0_4 = arith.constant 0 : index
    %19 = vector.load %arg3[%c0_3, %c0_4] : memref<64x1xf32, #tpu.memory_space<vmem>>, vector<64x1xf32>
    %20 = vector.broadcast %19 : vector<64x1xf32> to vector<64x128xf32>
    %21 = arith.addf %18, %20 : vector<64x128xf32>
    %22 = math.tanh %21 : vector<64x128xf32>
    %c0_5 = arith.constant 0 : index
    %c0_6 = arith.constant 0 : index
    %23 = vector.load %arg4[%c0_5, %c0_6] : memref<64x64xf32, #tpu.memory_space<vmem>>, vector<64x64xf32>
    %cst = arith.constant dense<0.000000e+00> : vector<64x128xf32>
    %24 = tpu.matmul %23, %22, %cst {dimension_numbers = #tpu.dot_dimension_numbers<[1], [0], [0], [1], [0, 0, 1, 1], [], []>, precision = #tpu.contract_precision<fp32>} : vector<64x64xf32>, vector<64x128xf32>, vector<64x128xf32> -> vector<64x128xf32>
    %c0_7 = arith.constant 0 : index
    %c0_8 = arith.constant 0 : index
    %25 = vector.load %arg5[%c0_7, %c0_8] : memref<64x1xf32, #tpu.memory_space<vmem>>, vector<64x1xf32>
    %26 = vector.broadcast %25 : vector<64x1xf32> to vector<64x128xf32>
    %27 = arith.addf %24, %26 : vector<64x128xf32>
    %28 = math.tanh %27 : vector<64x128xf32>
    %c0_9 = arith.constant 0 : index
    %c0_10 = arith.constant 0 : index
    %29 = vector.load %arg6[%c0_9, %c0_10] : memref<64x64xf32, #tpu.memory_space<vmem>>, vector<64x64xf32>
    %cst_11 = arith.constant dense<0.000000e+00> : vector<64x128xf32>
    %30 = tpu.matmul %29, %28, %cst_11 {dimension_numbers = #tpu.dot_dimension_numbers<[1], [0], [0], [1], [0, 0, 1, 1], [], []>, precision = #tpu.contract_precision<fp32>} : vector<64x64xf32>, vector<64x128xf32>, vector<64x128xf32> -> vector<64x128xf32>
    %c0_12 = arith.constant 0 : index
    %c0_13 = arith.constant 0 : index
    %31 = vector.load %arg7[%c0_12, %c0_13] : memref<64x1xf32, #tpu.memory_space<vmem>>, vector<64x1xf32>
    %32 = vector.broadcast %31 : vector<64x1xf32> to vector<64x128xf32>
    %33 = arith.addf %30, %32 : vector<64x128xf32>
    %34 = math.tanh %33 : vector<64x128xf32>
    %c0_14 = arith.constant 0 : index
    %c0_15 = arith.constant 0 : index
    %35 = vector.load %arg8[%c0_14, %c0_15] : memref<8x64xf32, #tpu.memory_space<vmem>>, vector<8x64xf32>
    %cst_16 = arith.constant dense<0.000000e+00> : vector<8x128xf32>
    %36 = tpu.matmul %35, %34, %cst_16 {dimension_numbers = #tpu.dot_dimension_numbers<[1], [0], [0], [1], [0, 0, 1, 1], [], []>, precision = #tpu.contract_precision<fp32>} : vector<8x64xf32>, vector<64x128xf32>, vector<8x128xf32> -> vector<8x128xf32>
    %c0_17 = arith.constant 0 : index
    %c0_18 = arith.constant 0 : index
    %37 = vector.load %arg9[%c0_17, %c0_18] : memref<8x1xf32, #tpu.memory_space<vmem>>, vector<8x1xf32>
    %38 = vector.broadcast %37 : vector<8x1xf32> to vector<8x128xf32>
    %39 = arith.addf %36, %38 : vector<8x128xf32>
    %c0_19 = arith.constant 0 : index
    %c0_20 = arith.constant 0 : index
    %40 = vector.load %arg10[%c0_19, %c0_20] : memref<8x128xf32, #tpu.memory_space<vmem>>, vector<8x128xf32>
    tpu.vector_store %arg10[%c0_19, %c0_20], %39 {strides = array<i32>} : memref<8x128xf32, #tpu.memory_space<vmem>>, vector<8x128xf32>,
    return
  }
  func.func @transform_0(%arg0: i32) -> (i32, i32) {
    %c0_i32 = arith.constant 0 : i32
    %c0_i32_0 = arith.constant 0 : i32
    return %c0_i32, %arg0 : i32, i32
  }
  func.func @transform_1(%arg0: i32) -> (i32, i32) {
    %c0_i32 = arith.constant 0 : i32
    %c0_i32_0 = arith.constant 0 : i32
    %c0_i32_1 = arith.constant 0 : i32
    return %c0_i32, %c0_i32_0 : i32, i32
  }
  func.func @transform_2(%arg0: i32) -> (i32, i32) {
    %c0_i32 = arith.constant 0 : i32
    %c0_i32_0 = arith.constant 0 : i32
    %c0_i32_1 = arith.constant 0 : i32
    return %c0_i32, %c0_i32_0 : i32, i32
  }
  func.func @transform_3(%arg0: i32) -> (i32, i32) {
    %c0_i32 = arith.constant 0 : i32
    %c0_i32_0 = arith.constant 0 : i32
    %c0_i32_1 = arith.constant 0 : i32
    return %c0_i32, %c0_i32_0 : i32, i32
  }
  func.func @transform_4(%arg0: i32) -> (i32, i32) {
    %c0_i32 = arith.constant 0 : i32
    %c0_i32_0 = arith.constant 0 : i32
    %c0_i32_1 = arith.constant 0 : i32
    return %c0_i32, %c0_i32_0 : i32, i32
  }
  func.func @transform_5(%arg0: i32) -> (i32, i32) {
    %c0_i32 = arith.constant 0 : i32
    %c0_i32_0 = arith.constant 0 : i32
    %c0_i32_1 = arith.constant 0 : i32
    return %c0_i32, %c0_i32_0 : i32, i32
  }
  func.func @transform_6(%arg0: i32) -> (i32, i32) {
    %c0_i32 = arith.constant 0 : i32
    %c0_i32_0 = arith.constant 0 : i32
    %c0_i32_1 = arith.constant 0 : i32
    return %c0_i32, %c0_i32_0 : i32, i32
  }
  func.func @transform_7(%arg0: i32) -> (i32, i32) {
    %c0_i32 = arith.constant 0 : i32
    %c0_i32_0 = arith.constant 0 : i32
    %c0_i32_1 = arith.constant 0 : i32
    return %c0_i32, %c0_i32_0 : i32, i32
  }
  func.func @transform_8(%arg0: i32) -> (i32, i32) {
    %c0_i32 = arith.constant 0 : i32
    %c0_i32_0 = arith.constant 0 : i32
    %c0_i32_1 = arith.constant 0 : i32
    return %c0_i32, %c0_i32_0 : i32, i32
  }
  func.func @transform_9(%arg0: i32) -> (i32, i32) {
    %c0_i32 = arith.constant 0 : i32
    %c0_i32_0 = arith.constant 0 : i32
    return %c0_i32, %arg0 : i32, i32
  }
}

</mosaic_0001>

<llo_original>
// kernel: tpu_custom_call.1
$region0: #{tpu_custom_call.1}
  #allocation0 [shape = 'u32[]', space=smem, size = 0x4, offset = 0x4, fixed_abs, tag = 'smem constant byte address 0x4 - core index']
  #allocation1 [shape = 'u32[144,128]{1,0:T(1,128)}', space=vmem, size = 0x12000, scoped, tag = 'internal scratch']
  %s0 = inlined_call_operand.vmem [shape: f32[3,256], index: 0, kind: input, shape index: {}]
  %s1 = inlined_call_operand.vmem [shape: f32[64,3], index: 1, kind: input, shape index: {}]
  %s2 = inlined_call_operand.vmem [shape: f32[64,1], index: 2, kind: input, shape index: {}]
  %s3 = inlined_call_operand.vmem [shape: f32[64,64], index: 3, kind: input, shape index: {}]
  %s4 = inlined_call_operand.vmem [shape: f32[64,1], index: 4, kind: input, shape index: {}]
  %s5 = inlined_call_operand.vmem [shape: f32[64,64], index: 5, kind: input, shape index: {}]
  %s6 = inlined_call_operand.vmem [shape: f32[64,1], index: 6, kind: input, shape index: {}]
  %s7 = inlined_call_operand.vmem [shape: f32[8,64], index: 7, kind: input, shape index: {}]
  %s8 = inlined_call_operand.vmem [shape: f32[8,1], index: 8, kind: input, shape index: {}]
  %s9 = inlined_call_operand.hbm [shape: f32[8,256], index: 9, kind: output, shape index: {}]
  %s10 = sld [smem:[#allocation0]]
  $region69: #{tpu_custom_call.1} parent=0
    _
  %s12 = ssub.s32 1, %s10
  %s13 = scalar_select 0, %s12, %s10
  $region1: #{tpu_custom_call.1} parent=0
    #allocation2 [shape = 'u8[8192]{0}', space=vmem, size = 0x2000, scoped, tag = 'output window, operand 0']
    #allocation3 [shape = 's32[2]{0}', space=sflag, size = 0x8, scoped, tag = 'scoped memory for tpu_custom_call.1']
    %14 = vsyncpa [#allocation3], 0
    %s15 = scalar_lea.sflag [#allocation3], 1
    %16 = vsyncpa %s15, 0
    loop: start=0, step=1, limit=4
    $region2: #{tpu_custom_call.1} parent=1 // loop_pre_header
      _
    $region3: #{tpu_custom_call.1} parent=1 // loop_header
      %s18 = sphi 0, %s22
      %p19 = scmp.ge.s32.totalorder %s18, 4
      %s28 = sphi 0, %s30
      %s31 = sphi 0, %s28
      %s32 = sphi 0, %s31
      %s48 = sphi 0, %s32
      %s52 = sphi 0, %s52
      %s54 = sphi 0, %s52
      %s55 = sphi 0, %s54
      %s69 = sphi 0, %s55
      %s73 = sphi 0, %s73
      %s75 = sphi 0, %s73
      %s76 = sphi 0, %s75
      %s90 = sphi 0, %s76
      %s94 = sphi 0, %s94
      %s96 = sphi 0, %s94
      %s97 = sphi 0, %s96
      %s111 = sphi 0, %s97
      %s115 = sphi 0, %s115
      %s117 = sphi 0, %s115
      %s118 = sphi 0, %s117
      %s132 = sphi 0, %s118
      %s136 = sphi 0, %s136
      %s138 = sphi 0, %s136
      %s139 = sphi 0, %s138
      %s153 = sphi 0, %s139
      %s157 = sphi 0, %s157
      %s159 = sphi 0, %s157
      %s160 = sphi 0, %s159
      %s174 = sphi 0, %s160
      %s178 = sphi 0, %s178
      %s180 = sphi 0, %s178
      %s181 = sphi 0, %s180
      %s195 = sphi 0, %s181
      %s199 = sphi 0, %s199
      %s201 = sphi 0, %s199
      %s202 = sphi 0, %s201
      %s216 = sphi 0, %s202
      %s222 = sphi 0, %s224
      %s225 = sphi 0, %s222
      %s226 = sphi 0, %s225
      %s242 = sphi 0, %s226
    $region4: #{tpu_custom_call.1} parent=1 // loop_header_branch
      %21 = sbr.rel (%p19) target = $region8
    $region5: #{tpu_custom_call.1} parent=1 // loop_body
      %s23 = ssub.s32 %s18, 1
      %s24 = ssub.s32 %s18, 2
      %s25 = sadd.s32 %s18, 1
      %s26 = ssub.s32 %s18, %s25
      %p27 = scmp.eq.s32.totalorder %s26, 0
      %s29 = sadd.s32 %s28, 1
      %s30 = scalar_select %p27, %s28, %s29
      %p33 = pneg %p27
      %p34 = scmp.eq.s32.totalorder %s18, 1
      %p35 = por %p33, %p34
      %p36 = scmp.ne.s32.totalorder %s28, %s31
      %p37 = scmp.eq.s32.totalorder %s18, 0
      %p38 = por %p36, %p37
      %p39 = scmp.ne.s32.totalorder %s28, %s31
      %p40 = scmp.eq.s32.totalorder %s23, 1
      %p41 = por %p39, %p40
      %p42 = scmp.ne.s32.totalorder %s31, %s32
      %p43 = scmp.eq.s32.totalorder %s23, 0
      %p44 = por %p42, %p43
      %p45 = scmp.ne.s32.totalorder %s31, %s32
      %p46 = scmp.eq.s32.totalorder %s24, 1
      %p47 = por %p45, %p46
      %p49 = scmp.ne.s32.totalorder %s32, %s48
      %p50 = scmp.eq.s32.totalorder %s24, 0
      %p51 = por %p49, %p50
      %s53 = sadd.s32 %s52, 1
      %p56 = scmp.eq.s32.totalorder %s18, 1
      %p57 = scmp.ne.s32.totalorder %s52, %s54
      %p58 = scmp.eq.s32.totalorder %s18, 0
      %p59 = por %p57, %p58
      %p60 = scmp.ne.s32.totalorder %s52, %s54
      %p61 = scmp.eq.s32.totalorder %s23, 1
      %p62 = por %p60, %p61
      %p63 = scmp.ne.s32.totalorder %s54, %s55
      %p64 = scmp.eq.s32.totalorder %s23, 0
      %p65 = por %p63, %p64
      %p66 = scmp.ne.s32.totalorder %s54, %s55
      %p67 = scmp.eq.s32.totalorder %s24, 1
      %p68 = por %p66, %p67
      %p70 = scmp.ne.s32.totalorder %s55, %s69
      %p71 = scmp.eq.s32.totalorder %s24, 0
      %p72 = por %p70, %p71
      %s74 = sadd.s32 %s73, 1
      %p77 = scmp.eq.s32.totalorder %s18, 1
      %p78 = scmp.ne.s32.totalorder %s73, %s75
      %p79 = scmp.eq.s32.totalorder %s18, 0
      %p80 = por %p78, %p79
      %p81 = scmp.ne.s32.totalorder %s73, %s75
      %p82 = scmp.eq.s32.totalorder %s23, 1
      %p83 = por %p81, %p82
      %p84 = scmp.ne.s32.totalorder %s75, %s76
      %p85 = scmp.eq.s32.totalorder %s23, 0
      %p86 = por %p84, %p85
      %p87 = scmp.ne.s32.totalorder %s75, %s76
      %p88 = scmp.eq.s32.totalorder %s24, 1
      %p89 = por %p87, %p88
      %p91 = scmp.ne.s32.totalorder %s76, %s90
      %p92 = scmp.eq.s32.totalorder %s24, 0
      %p93 = por %p91, %p92
      %s95 = sadd.s32 %s94, 1
      %p98 = scmp.eq.s32.totalorder %s18, 1
      %p99 = scmp.ne.s32.totalorder %s94, %s96
      %p100 = scmp.eq.s32.totalorder %s18, 0
      %p101 = por %p99, %p100
      %p102 = scmp.ne.s32.totalorder %s94, %s96
      %p103 = scmp.eq.s32.totalorder %s23, 1
      %p104 = por %p102, %p103
      %p105 = scmp.ne.s32.totalorder %s96, %s97
      %p106 = scmp.eq.s32.totalorder %s23, 0
      %p107 = por %p105, %p106
      %p108 = scmp.ne.s32.totalorder %s96, %s97
      %p109 = scmp.eq.s32.totalorder %s24, 1
      %p110 = por %p108, %p109
      %p112 = scmp.ne.s32.totalorder %s97, %s111
      %p113 = scmp.eq.s32.totalorder %s24, 0
      %p114 = por %p112, %p113
      %s116 = sadd.s32 %s115, 1
      %p119 = scmp.eq.s32.totalorder %s18, 1
      %p120 = scmp.ne.s32.totalorder %s115, %s117
      %p121 = scmp.eq.s32.totalorder %s18, 0
      %p122 = por %p120, %p121
      %p123 = scmp.ne.s32.totalorder %s115, %s117
      %p124 = scmp.eq.s32.totalorder %s23, 1
      %p125 = por %p123, %p124
      %p126 = scmp.ne.s32.totalorder %s117, %s118
      %p127 = scmp.eq.s32.totalorder %s23, 0
      %p128 = por %p126, %p127
      %p129 = scmp.ne.s32.totalorder %s117, %s118
      %p130 = scmp.eq.s32.totalorder %s24, 1
      %p131 = por %p129, %p130
      %p133 = scmp.ne.s32.totalorder %s118, %s132
      %p134 = scmp.eq.s32.totalorder %s24, 0
      %p135 = por %p133, %p134
      %s137 = sadd.s32 %s136, 1
      %p140 = scmp.eq.s32.totalorder %s18, 1
      %p141 = scmp.ne.s32.totalorder %s136, %s138
      %p142 = scmp.eq.s32.totalorder %s18, 0
      %p143 = por %p141, %p142
      %p144 = scmp.ne.s32.totalorder %s136, %s138
      %p145 = scmp.eq.s32.totalorder %s23, 1
      %p146 = por %p144, %p145
      %p147 = scmp.ne.s32.totalorder %s138, %s139
      %p148 = scmp.eq.s32.totalorder %s23, 0
      %p149 = por %p147, %p148
      %p150 = scmp.ne.s32.totalorder %s138, %s139
      %p151 = scmp.eq.s32.totalorder %s24, 1
      %p152 = por %p150, %p151
      %p154 = scmp.ne.s32.totalorder %s139, %s153
      %p155 = scmp.eq.s32.totalorder %s24, 0
      %p156 = por %p154, %p155
      %s158 = sadd.s32 %s157, 1
      %p161 = scmp.eq.s32.totalorder %s18, 1
      %p162 = scmp.ne.s32.totalorder %s157, %s159
      %p163 = scmp.eq.s32.totalorder %s18, 0
      %p164 = por %p162, %p163
      %p165 = scmp.ne.s32.totalorder %s157, %s159
      %p166 = scmp.eq.s32.totalorder %s23, 1
      %p167 = por %p165, %p166
      %p168 = scmp.ne.s32.totalorder %s159, %s160
      %p169 = scmp.eq.s32.totalorder %s23, 0
      %p170 = por %p168, %p169
      %p171 = scmp.ne.s32.totalorder %s159, %s160
      %p172 = scmp.eq.s32.totalorder %s24, 1
      %p173 = por %p171, %p172
      %p175 = scmp.ne.s32.totalorder %s160, %s174
      %p176 = scmp.eq.s32.totalorder %s24, 0
      %p177 = por %p175, %p176
      %s179 = sadd.s32 %s178, 1
      %p182 = scmp.eq.s32.totalorder %s18, 1
      %p183 = scmp.ne.s32.totalorder %s178, %s180
      %p184 = scmp.eq.s32.totalorder %s18, 0
      %p185 = por %p183, %p184
      %p186 = scmp.ne.s32.totalorder %s178, %s180
      %p187 = scmp.eq.s32.totalorder %s23, 1
      %p188 = por %p186, %p187
      %p189 = scmp.ne.s32.totalorder %s180, %s181
      %p190 = scmp.eq.s32.totalorder %s23, 0
      %p191 = por %p189, %p190
      %p192 = scmp.ne.s32.totalorder %s180, %s181
      %p193 = scmp.eq.s32.totalorder %s24, 1
      %p194 = por %p192, %p193
      %p196 = scmp.ne.s32.totalorder %s181, %s195
      %p197 = scmp.eq.s32.totalorder %s24, 0
      %p198 = por %p196, %p197
      %s200 = sadd.s32 %s199, 1
      %p203 = scmp.eq.s32.totalorder %s18, 1
      %p204 = scmp.ne.s32.totalorder %s199, %s201
      %p205 = scmp.eq.s32.totalorder %s18, 0
      %p206 = por %p204, %p205
      %p207 = scmp.ne.s32.totalorder %s199, %s201
      %p208 = scmp.eq.s32.totalorder %s23, 1
      %p209 = por %p207, %p208
      %p210 = scmp.ne.s32.totalorder %s201, %s202
      %p211 = scmp.eq.s32.totalorder %s23, 0
      %p212 = por %p210, %p211
      %p213 = scmp.ne.s32.totalorder %s201, %s202
      %p214 = scmp.eq.s32.totalorder %s24, 1
      %p215 = por %p213, %p214
      %p217 = scmp.ne.s32.totalorder %s202, %s216
      %p218 = scmp.eq.s32.totalorder %s24, 0
      %p219 = por %p217, %p218
      %s220 = ssub.s32 %s18, %s25
      %p221 = scmp.eq.s32.totalorder %s220, 0
      %s223 = sadd.s32 %s222, 1
      %s224 = scalar_select %p221, %s222, %s223
      %p227 = pneg %p221
      %p228 = scmp.eq.s32.totalorder %s18, 1
      %p229 = por %p227, %p228
      %p230 = scmp.ne.s32.totalorder %s222, %s225
      %p231 = scmp.eq.s32.totalorder %s18, 0
      %p232 = por %p230, %p231
      %p233 = scmp.ne.s32.totalorder %s222, %s225
      %p234 = scmp.eq.s32.totalorder %s23, 1
      %p235 = por %p233, %p234
      %p236 = scmp.ne.s32.totalorder %s225, %s226
      %p237 = scmp.eq.s32.totalorder %s23, 0
      %p238 = por %p236, %p237
      %p239 = scmp.ne.s32.totalorder %s225, %s226
      %p240 = scmp.eq.s32.totalorder %s24, 1
      %p241 = por %p239, %p240
      %p243 = scmp.ne.s32.totalorder %s226, %s242
      %p244 = scmp.eq.s32.totalorder %s24, 0
      %p245 = por %p243, %p244
      %p246 = scmp.le.s32.totalorder 1, %s18
      %p247 = scmp.lt.s32.totalorder %s18, 3
      %p248 = pnand %p246, %p247
      %p249 = pneg %p248
      // Predicated region
      $region9: #{tpu_custom_call.1} parent=5 // pred_check
        _
      $region10: #{tpu_custom_call.1} parent=5 // pred_check_branch
        %251 = sbr.rel (%p248) target = $region12
      $region11: #{tpu_custom_call.1} parent=5 // pred_region
        %s252 = ssub.s32 %s18, 1
        // Predicated region
        $region13: #{tpu_custom_call.1} parent=11 // pred_check
          %p253 = pneg %p65
        $region14: #{tpu_custom_call.1} parent=11 // pred_check_branch
          %255 = sbr.rel (%p253) target = $region16
        $region15: #{tpu_custom_call.1} parent=11 // pred_region
          _
        $region16: #{tpu_custom_call.1} parent=11 // pred_fallthru
          _
        // Predicated region
        $region17: #{tpu_custom_call.1} parent=11 // pred_check
          %p256 = pneg %p86
        $region18: #{tpu_custom_call.1} parent=11 // pred_check_branch
          %258 = sbr.rel (%p256) target = $region20
        $region19: #{tpu_custom_call.1} parent=11 // pred_region
          _
        $region20: #{tpu_custom_call.1} parent=11 // pred_fallthru
          _
        // Predicated region
        $region21: #{tpu_custom_call.1} parent=11 // pred_check
          %p259 = pneg %p107
        $region22: #{tpu_custom_call.1} parent=11 // pred_check_branch
          %261 = sbr.rel (%p259) target = $region24
        $region23: #{tpu_custom_call.1} parent=11 // pred_region
          _
        $region24: #{tpu_custom_call.1} parent=11 // pred_fallthru
          _
        // Predicated region
        $region25: #{tpu_custom_call.1} parent=11 // pred_check
          %p262 = pneg %p128
        $region26: #{tpu_custom_call.1} parent=11 // pred_check_branch
          %264 = sbr.rel (%p262) target = $region28
        $region27: #{tpu_custom_call.1} parent=11 // pred_region
          _
        $region28: #{tpu_custom_call.1} parent=11 // pred_fallthru
          _
        // Predicated region
        $region29: #{tpu_custom_call.1} parent=11 // pred_check
          %p265 = pneg %p149
        $region30: #{tpu_custom_call.1} parent=11 // pred_check_branch
          %267 = sbr.rel (%p265) target = $region32
        $region31: #{tpu_custom_call.1} parent=11 // pred_region
          _
        $region32: #{tpu_custom_call.1} parent=11 // pred_fallthru
          _
        // Predicated region
        $region33: #{tpu_custom_call.1} parent=11 // pred_check
          %p268 = pneg %p170
        $region34: #{tpu_custom_call.1} parent=11 // pred_check_branch
          %270 = sbr.rel (%p268) target = $region36
        $region35: #{tpu_custom_call.1} parent=11 // pred_region
          _
        $region36: #{tpu_custom_call.1} parent=11 // pred_fallthru
          _
        // Predicated region
        $region37: #{tpu_custom_call.1} parent=11 // pred_check
          %p271 = pneg %p191
        $region38: #{tpu_custom_call.1} parent=11 // pred_check_branch
          %273 = sbr.rel (%p271) target = $region40
        $region39: #{tpu_custom_call.1} parent=11 // pred_region
          _
        $region40: #{tpu_custom_call.1} parent=11 // pred_fallthru
          _
        // Predicated region
        $region41: #{tpu_custom_call.1} parent=11 // pred_check
          %p274 = pneg %p212
        $region42: #{tpu_custom_call.1} parent=11 // pred_check_branch
          %276 = sbr.rel (%p274) target = $region44
        $region43: #{tpu_custom_call.1} parent=11 // pred_region
          _
        $region44: #{tpu_custom_call.1} parent=11 // pred_fallthru
          _
      $region12: #{tpu_custom_call.1} parent=5 // pred_fallthru
        _
      %p277 = scmp.lt.s32.totalorder %s18, 2
      // Predicated region
      $region45: #{tpu_custom_call.1} parent=5 // pred_check
        %p278 = pneg %p277
      $region46: #{tpu_custom_call.1} parent=5 // pred_check_branch
        %280 = sbr.rel (%p278) target = $region48
      $region47: #{tpu_custom_call.1} parent=5 // pred_region
        // Predicated region
        $region49: #{tpu_custom_call.1} parent=47 // pred_check
          %p281 = pneg %p38
        $region50: #{tpu_custom_call.1} parent=47 // pred_check_branch
          %283 = sbr.rel (%p281) target = $region52
        $region51: #{tpu_custom_call.1} parent=47 // pred_region
          %p284 = scmp.lt.s32.totalorder %s18, 1
          %s285 = scalar_select %p284, %s18, 1
          %s286 = smul.addr %s285, 4
          %s287 = scalar_lea.vmem %s0, %s286
        $region52: #{tpu_custom_call.1} parent=47 // pred_fallthru
          _
      $region48: #{tpu_custom_call.1} parent=5 // pred_fallthru
        _
      %p288 = scmp.le.s32.totalorder 1, %s18
      %p289 = scmp.lt.s32.totalorder %s18, 3
      %p290 = pnand %p288, %p289
      %p291 = pneg %p290
      // Predicated region
      $region53: #{tpu_custom_call.1} parent=5 // pred_check
        _
      $region54: #{tpu_custom_call.1} parent=5 // pred_check_branch
        %293 = sbr.rel (%p290) target = $region56
      $region55: #{tpu_custom_call.1} parent=5 // pred_region
        %s294 = ssub.s32 %s18, 1
        %p295 = scmp.lt.s32.totalorder %s23, 1
        %s296 = scalar_select %p295, %s23, 1
        %s297 = smul.addr %s296, 4
        %s298 = scalar_lea.vmem %s0, %s297
        %p299 = pneg %p44
        %p300 = pneg %p41
        %p301 = pneg %p65
        %p302 = pneg %p62
        %p303 = pneg %p86
        %p304 = pneg %p83
        %p305 = pneg %p107
        %p306 = pneg %p104
        %p307 = pneg %p128
        %p308 = pneg %p125
        %p309 = pneg %p149
        %p310 = pneg %p146
        %p311 = pneg %p170
        %p312 = pneg %p167
        %p313 = pneg %p191
        %p314 = pneg %p188
        %p315 = pneg %p212
        %p316 = pneg %p209
        %p317 = pneg %p238
        %p318 = pneg %p235
        %s319 = sand.u32 %s225, 1
        %s320 = scalar_lea.sflag [#allocation3], %s319
        %s321 = sand.u32 %s225, 1
        %s322 = smul.addr %s321, 8
        %s323 = scalar_lea.vmem [#allocation2], %s322
        %p324 = scmp.lt.s32.totalorder %s23, 1
        %s325 = scalar_select %p324, %s23, 1
        %s326 = smul.addr %s325, 4
        %s327 = scalar_lea.vmem %s0, %s326
        %v328 = vld [vmem:[%s327] sm:$0x7]
        %v329 = vld [vmem:[%s1] sm:$0xff]
        %v330 = vld [vmem:[%s1 + $0x8] sm:$0xff]
        %v331 = vld [vmem:[%s1 + $0x10] sm:$0xff]
        %v332 = vld [vmem:[%s1 + $0x18] sm:$0xff]
        %v333 = vld [vmem:[%s1 + $0x20] sm:$0xff]
        %v334 = vld [vmem:[%s1 + $0x28] sm:$0xff]
        %v335 = vld [vmem:[%s1 + $0x30] sm:$0xff]
        %v336 = vld [vmem:[%s1 + $0x38] sm:$0xff]
        %338 = vset.pattern.permute.xlu0 0
        %339 = vperm.xlu0 %338, %v329
        %v340 = vpop.permute.xlu0 %339
        %343 = vset.pattern.permute.xlu0 0
        %344 = vperm.xlu0 %343, %v330
        %v345 = vpop.permute.xlu0 %344
        %348 = vset.pattern.permute.xlu0 0
        %349 = vperm.xlu0 %348, %v331
        %v350 = vpop.permute.xlu0 %349
        %353 = vset.pattern.permute.xlu0 0
        %354 = vperm.xlu0 %353, %v332
        %v355 = vpop.permute.xlu0 %354
        %358 = vset.pattern.permute.xlu0 0
        %359 = vperm.xlu0 %358, %v333
        %v360 = vpop.permute.xlu0 %359
        %363 = vset.pattern.permute.xlu0 0
        %364 = vperm.xlu0 %363, %v334
        %v365 = vpop.permute.xlu0 %364
        %368 = vset.pattern.permute.xlu0 0
        %369 = vperm.xlu0 %368, %v335
        %v370 = vpop.permute.xlu0 %369
        %373 = vset.pattern.permute.xlu0 0
        %374 = vperm.xlu0 %373, %v336
        %v375 = vpop.permute.xlu0 %374
        %v377 = vlaneseq
        %v378 = vshrl.u32 %v377, 7
        %v379 = vsub.s32 0, %v378
        %v380 = vrot.slane %v328, %v379
        %v381 = vmul.f32 %v340, %v380
        %v382 = vmul.f32 %v345, %v380
        %v383 = vmul.f32 %v350, %v380
        %v384 = vmul.f32 %v355, %v380
        %v385 = vmul.f32 %v360, %v380
        %v386 = vmul.f32 %v365, %v380
        %v387 = vmul.f32 %v370, %v380
        %v388 = vmul.f32 %v375, %v380
        %389 = vset.pattern.permute.xlu0 1
        %390 = vperm.xlu0 %389, %v329
        %v391 = vpop.permute.xlu0 %390
        %393 = vset.pattern.permute.xlu0 1
        %394 = vperm.xlu0 %393, %v330
        %v395 = vpop.permute.xlu0 %394
        %397 = vset.pattern.permute.xlu0 1
        %398 = vperm.xlu0 %397, %v331
        %v399 = vpop.permute.xlu0 %398
        %401 = vset.pattern.permute.xlu0 1
        %402 = vperm.xlu0 %401, %v332
        %v403 = vpop.permute.xlu0 %402
        %405 = vset.pattern.permute.xlu0 1
        %406 = vperm.xlu0 %405, %v333
        %v407 = vpop.permute.xlu0 %406
        %409 = vset.pattern.permute.xlu0 1
        %410 = vperm.xlu0 %409, %v334
        %v411 = vpop.permute.xlu0 %410
        %413 = vset.pattern.permute.xlu0 1
        %414 = vperm.xlu0 %413, %v335
        %v415 = vpop.permute.xlu0 %414
        %417 = vset.pattern.permute.xlu0 1
        %418 = vperm.xlu0 %417, %v336
        %v419 = vpop.permute.xlu0 %418
        %v421 = vlaneseq
        %v422 = vshrl.u32 %v421, 7
        %v423 = vsub.s32 1, %v422
        %v424 = vrot.slane %v328, %v423
        %v425 = vmul.f32 %v391, %v424
        %v426 = vmul.f32 %v395, %v424
        %v427 = vmul.f32 %v399, %v424
        %v428 = vmul.f32 %v403, %v424
        %v429 = vmul.f32 %v407, %v424
        %v430 = vmul.f32 %v411, %v424
        %v431 = vmul.f32 %v415, %v424
        %v432 = vmul.f32 %v419, %v424
        %v433 = vadd.f32 %v381, %v425
        %v434 = vadd.f32 %v382, %v426
        %v435 = vadd.f32 %v383, %v427
        %v436 = vadd.f32 %v384, %v428
        %v437 = vadd.f32 %v385, %v429
        %v438 = vadd.f32 %v386, %v430
        %v439 = vadd.f32 %v387, %v431
        %v440 = vadd.f32 %v388, %v432
        %441 = vset.pattern.permute.xlu0 2
        %442 = vperm.xlu0 %441, %v329
        %v443 = vpop.permute.xlu0 %442
        %445 = vset.pattern.permute.xlu0 2
        %446 = vperm.xlu0 %445, %v330
        %v447 = vpop.permute.xlu0 %446
        %449 = vset.pattern.permute.xlu0 2
        %450 = vperm.xlu0 %449, %v331
        %v451 = vpop.permute.xlu0 %450
        %453 = vset.pattern.permute.xlu0 2
        %454 = vperm.xlu0 %453, %v332
        %v455 = vpop.permute.xlu0 %454
        %457 = vset.pattern.permute.xlu0 2
        %458 = vperm.xlu0 %457, %v333
        %v459 = vpop.permute.xlu0 %458
        %461 = vset.pattern.permute.xlu0 2
        %462 = vperm.xlu0 %461, %v334
        %v463 = vpop.permute.xlu0 %462
        %465 = vset.pattern.permute.xlu0 2
        %466 = vperm.xlu0 %465, %v335
        %v467 = vpop.permute.xlu0 %466
        %469 = vset.pattern.permute.xlu0 2
        %470 = vperm.xlu0 %469, %v336
        %v471 = vpop.permute.xlu0 %470
        %v473 = vlaneseq
        %v474 = vshrl.u32 %v473, 7
        %v475 = vsub.s32 2, %v474
        %v476 = vrot.slane %v328, %v475
        %v477 = vmul.f32 %v443, %v476
        %v478 = vmul.f32 %v447, %v476
        %v479 = vmul.f32 %v451, %v476
        %v480 = vmul.f32 %v455, %v476
        %v481 = vmul.f32 %v459, %v476
        %v482 = vmul.f32 %v463, %v476
        %v483 = vmul.f32 %v467, %v476
        %v484 = vmul.f32 %v471, %v476
        %v485 = vadd.f32 %v433, %v477
        %v486 = vadd.f32 %v434, %v478
        %v487 = vadd.f32 %v435, %v479
        %v488 = vadd.f32 %v436, %v480
        %v489 = vadd.f32 %v437, %v481
        %v490 = vadd.f32 %v438, %v482
        %v491 = vadd.f32 %v439, %v483
        %v492 = vadd.f32 %v440, %v484
        %v493 = vld [vmem:[%s2] sm:$0xff]
        %v494 = vld [vmem:[%s2 + $0x8] sm:$0xff]
        %v495 = vld [vmem:[%s2 + $0x10] sm:$0xff]
        %v496 = vld [vmem:[%s2 + $0x18] sm:$0xff]
        %v497 = vld [vmem:[%s2 + $0x20] sm:$0xff]
        %v498 = vld [vmem:[%s2 + $0x28] sm:$0xff]
        %v499 = vld [vmem:[%s2 + $0x30] sm:$0xff]
        %v500 = vld [vmem:[%s2 + $0x38] sm:$0xff]
        %502 = vset.pattern.permute.xlu0 0
        %503 = vperm.xlu0 %502, %v493
        %v504 = vpop.permute.xlu0 %503
        %507 = vset.pattern.permute.xlu0 0
        %508 = vperm.xlu0 %507, %v494
        %v509 = vpop.permute.xlu0 %508
        %512 = vset.pattern.permute.xlu0 0
        %513 = vperm.xlu0 %512, %v495
        %v514 = vpop.permute.xlu0 %513
        %517 = vset.pattern.permute.xlu0 0
        %518 = vperm.xlu0 %517, %v496
        %v519 = vpop.permute.xlu0 %518
        %522 = vset.pattern.permute.xlu0 0
        %523 = vperm.xlu0 %522, %v497
        %v524 = vpop.permute.xlu0 %523
        %527 = vset.pattern.permute.xlu0 0
        %528 = vperm.xlu0 %527, %v498
        %v529 = vpop.permute.xlu0 %528
        %532 = vset.pattern.permute.xlu0 0
        %533 = vperm.xlu0 %532, %v499
        %v534 = vpop.permute.xlu0 %533
        %537 = vset.pattern.permute.xlu0 0
        %538 = vperm.xlu0 %537, %v500
        %v539 = vpop.permute.xlu0 %538
        %v541 = vadd.f32 %v485, %v504
        %v542 = vadd.f32 %v486, %v509
        %v543 = vadd.f32 %v487, %v514
        %v544 = vadd.f32 %v488, %v519
        %v545 = vadd.f32 %v489, %v524
        %v546 = vadd.f32 %v490, %v529
        %v547 = vadd.f32 %v491, %v534
        %v548 = vadd.f32 %v492, %v539
        %v549 = vtanh.pop %v541
        %v550 = vtanh.pop %v542
        %v551 = vtanh.pop %v543
        %v552 = vtanh.pop %v544
        %v553 = vtanh.pop %v545
        %v554 = vtanh.pop %v546
        %v555 = vtanh.pop %v547
        %v556 = vtanh.pop %v548
        %v557 = vld [vmem:[%s3] sm:$0xff]
        %v558 = vld [vmem:[%s3 + $0x8] sm:$0xff]
        %v559 = vld [vmem:[%s3 + $0x10] sm:$0xff]
        %v560 = vld [vmem:[%s3 + $0x18] sm:$0xff]
        %v561 = vld [vmem:[%s3 + $0x20] sm:$0xff]
        %v562 = vld [vmem:[%s3 + $0x28] sm:$0xff]
        %v563 = vld [vmem:[%s3 + $0x30] sm:$0xff]
        %v564 = vld [vmem:[%s3 + $0x38] sm:$0xff]
        %v565 = vld [vmem:[%s4] sm:$0xff]
        %v566 = vld [vmem:[%s4 + $0x8] sm:$0xff]
        %v567 = vld [vmem:[%s4 + $0x10] sm:$0xff]
        %v568 = vld [vmem:[%s4 + $0x18] sm:$0xff]
        %v569 = vld [vmem:[%s4 + $0x20] sm:$0xff]
        %v570 = vld [vmem:[%s4 + $0x28] sm:$0xff]
        %v571 = vld [vmem:[%s4 + $0x30] sm:$0xff]
        %v572 = vld [vmem:[%s4 + $0x38] sm:$0xff]
        %574 = vset.pattern.permute.xlu0 0
        %575 = vperm.xlu0 %574, %v565
        %v576 = vpop.permute.xlu0 %575
        %579 = vset.pattern.permute.xlu0 0
        %580 = vperm.xlu0 %579, %v566
        %v581 = vpop.permute.xlu0 %580
        %584 = vset.pattern.permute.xlu0 0
        %585 = vperm.xlu0 %584, %v567
        %v586 = vpop.permute.xlu0 %585
        %589 = vset.pattern.permute.xlu0 0
        %590 = vperm.xlu0 %589, %v568
        %v591 = vpop.permute.xlu0 %590
        %594 = vset.pattern.permute.xlu0 0
        %595 = vperm.xlu0 %594, %v569
        %v596 = vpop.permute.xlu0 %595
        %599 = vset.pattern.permute.xlu0 0
        %600 = vperm.xlu0 %599, %v570
        %v601 = vpop.permute.xlu0 %600
        %604 = vset.pattern.permute.xlu0 0
        %605 = vperm.xlu0 %604, %v571
        %v606 = vpop.permute.xlu0 %605
        %609 = vset.pattern.permute.xlu0 0
        %610 = vperm.xlu0 %609, %v572
        %v611 = vpop.permute.xlu0 %610
        %vm613 = vcmask 523264
        %v615 = vsel %vm613, %v557, 0
        %v618 = vsel %vm613, %v558, 0
        %v621 = vsel %vm613, %v559, 0
        %v624 = vsel %vm613, %v560, 0
        %v627 = vsel %vm613, %v561, 0
        %v630 = vsel %vm613, %v562, 0
        %v633 = vsel %vm613, %v563, 0
        %v636 = vsel %vm613, %v564, 0
        %638 = vmatprep.subr.mxu0 0.0
        %v639 = vand.u32 %v549, 4294901760
        %640 = vmatpush1.msra.mxu0 %v639
        %641 = vmatprep.subr.mxu0 0.0
        %v642 = vand.u32 %v550, 4294901760
        %643 = vmatpush1.msra.mxu0 %v642
        %644 = vmatprep.subr.mxu0 0.0
        %v645 = vand.u32 %v551, 4294901760
        %646 = vmatpush1.msra.mxu0 %v645
        %647 = vmatprep.subr.mxu0 0.0
        %v648 = vand.u32 %v552, 4294901760
        %649 = vmatpush1.msra.mxu0 %v648
        %650 = vmatprep.subr.mxu0 0.0
        %v651 = vand.u32 %v553, 4294901760
        %652 = vmatpush1.msra.mxu0 %v651
        %653 = vmatprep.subr.mxu0 0.0
        %v654 = vand.u32 %v554, 4294901760
        %655 = vmatpush1.msra.mxu0 %v654
        %656 = vmatprep.subr.mxu0 0.0
        %v657 = vand.u32 %v555, 4294901760
        %658 = vmatpush1.msra.mxu0 %v657
        %659 = vmatprep.subr.mxu0 0.0
        %v660 = vand.u32 %v556, 4294901760
        %661 = vmatpush1.msra.mxu0 %v660
        %662 = vmatprep.subr.mxu0 0.0
        %663 = vmatpush1.msra.mxu0 0.0
        %664 = vmatprep.subr.mxu0 0.0
        %665 = vmatpush1.msra.mxu0 0.0
        %666 = vmatprep.subr.mxu0 0.0
        %667 = vmatpush1.msra.mxu0 0.0
        %668 = vmatprep.subr.mxu0 0.0
        %669 = vmatpush1.msra.mxu0 0.0
        %670 = vmatprep.subr.mxu0 0.0
        %671 = vmatpush1.msra.mxu0 0.0
        %672 = vmatprep.subr.mxu0 0.0
        %673 = vmatpush1.msra.mxu0 0.0
        %674 = vmatprep.subr.mxu0 0.0
        %675 = vmatpush1.msra.mxu0 0.0
        %676 = vmatprep.subr.mxu0 0.0
        %677 = vmatpush1.msra.mxu0 0.0
        %678 = vmatprep.subr.mxu0 0.0
        %679 = vmatpush1.msra.mxu0 0.0
        %680 = vmatprep.subr.mxu0 0.0
        %681 = vmatpush1.msra.mxu0 0.0
        %682 = vmatprep.subr.mxu0 0.0
        %683 = vmatpush1.msra.mxu0 0.0
        %684 = vmatprep.subr.mxu0 0.0
        %685 = vmatpush1.msra.mxu0 0.0
        %686 = vmatprep.subr.mxu0 0.0
        %687 = vmatpush1.msra.mxu0 0.0
        %688 = vmatprep.subr.mxu0 0.0
        %689 = vmatpush1.msra.mxu0 0.0
        %690 = vmatprep.subr.mxu0 0.0
        %691 = vmatpush1.msra.mxu0 0.0
        %692 = vmatprep.subr.mxu0 0.0
        %693 = vmatpush1.msra.mxu0 0.0
        %694 = vmatprep.subr.mxu0 0.0
        %695 = vmatpush1.msra.mxu0 0.0
        %696 = vmatprep.subr.mxu0 0.0
        %697 = vmatpush1.msra.mxu0 0.0
        %698 = vmatprep.subr.mxu0 0.0
        %699 = vmatpush1.msra.mxu0 0.0
        %700 = vmatprep.subr.mxu0 0.0
        %701 = vmatpush1.msra.mxu0 0.0
        %702 = vmatprep.subr.mxu0 0.0
        %703 = vmatpush1.msra.mxu0 0.0
        %704 = vmatprep.subr.mxu0 0.0
        %705 = vmatpush1.msra.mxu0 0.0
        %706 = vmatprep.subr.mxu0 0.0
        %707 = vmatpush1.msra.mxu0 0.0
        %708 = vmatprep.subr.mxu0 0.0
        %709 = vmatpush1.msra.mxu0 0.0
        %710 = vmatprep.mubr.f32.mxu0 0.0
        %v711 = vand.u32 %v615, 4294901760
        %v712 = vsub.f32 %v615, %v711
        %v713 = vand.u32 %v712, 4294901760
        %v714 = vsub.f32 %v712, %v713
        %v715 = vand.u32 %v714, 4294901760
        %716 = vmatmul.mubr.f32.gmra.mrb[0].mxu0 %v715
        %v717 = vpop.f32.mrb[0].mxu0
        %v718 = vadd.f32 %v576, %v717
        %v719 = vpop.f32.mrb[0].mxu0
        %720 = vmatprep.mubr.f32.mxu0 0.0
        %v721 = vand.u32 %v618, 4294901760
        %v722 = vsub.f32 %v618, %v721
        %v723 = vand.u32 %v722, 4294901760
        %v724 = vsub.f32 %v722, %v723
        %v725 = vand.u32 %v724, 4294901760
        %726 = vmatmul.mubr.f32.gmra.mrb[0].mxu0 %v725
        %v727 = vpop.f32.mrb[0].mxu0
        %v728 = vadd.f32 %v581, %v727
        %v729 = vpop.f32.mrb[0].mxu0
        %730 = vmatprep.mubr.f32.mxu0 0.0
        %v731 = vand.u32 %v621, 4294901760
        %v732 = vsub.f32 %v621, %v731
        %v733 = vand.u32 %v732, 4294901760
        %v734 = vsub.f32 %v732, %v733
        %v735 = vand.u32 %v734, 4294901760
        %736 = vmatmul.mubr.f32.gmra.mrb[0].mxu0 %v735
        %v737 = vpop.f32.mrb[0].mxu0
        %v738 = vadd.f32 %v586, %v737
        %v739 = vpop.f32.mrb[0].mxu0
        %740 = vmatprep.mubr.f32.mxu0 0.0
        %v741 = vand.u32 %v624, 4294901760
        %v742 = vsub.f32 %v624, %v741
        %v743 = vand.u32 %v742, 4294901760
        %v744 = vsub.f32 %v742, %v743
        %v745 = vand.u32 %v744, 4294901760
        %746 = vmatmul.mubr.f32.gmra.mrb[0].mxu0 %v745
        %v747 = vpop.f32.mrb[0].mxu0
        %v748 = vadd.f32 %v591, %v747
        %v749 = vpop.f32.mrb[0].mxu0
        %750 = vmatprep.mubr.f32.mxu0 0.0
        %v751 = vand.u32 %v627, 4294901760
        %v752 = vsub.f32 %v627, %v751
        %v753 = vand.u32 %v752, 4294901760
        %v754 = vsub.f32 %v752, %v753
        %v755 = vand.u32 %v754, 4294901760
        %756 = vmatmul.mubr.f32.gmra.mrb[0].mxu0 %v755
        %v757 = vpop.f32.mrb[0].mxu0
        %v758 = vadd.f32 %v596, %v757
        %v759 = vpop.f32.mrb[0].mxu0
        %760 = vmatprep.mubr.f32.mxu0 0.0
        %v761 = vand.u32 %v630, 4294901760
        %v762 = vsub.f32 %v630, %v761
        %v763 = vand.u32 %v762, 4294901760
        %v764 = vsub.f32 %v762, %v763
        %v765 = vand.u32 %v764, 4294901760
        %766 = vmatmul.mubr.f32.gmra.mrb[0].mxu0 %v765
        %v767 = vpop.f32.mrb[0].mxu0
        %v768 = vadd.f32 %v601, %v767
        %v769 = vpop.f32.mrb[0].mxu0
        %770 = vmatprep.mubr.f32.mxu0 0.0
        %v771 = vand.u32 %v633, 4294901760
        %v772 = vsub.f32 %v633, %v771
        %v773 = vand.u32 %v772, 4294901760
        %v774 = vsub.f32 %v772, %v773
        %v775 = vand.u32 %v774, 4294901760
        %776 = vmatmul.mubr.f32.gmra.mrb[0].mxu0 %v775
        %v777 = vpop.f32.mrb[0].mxu0
        %v778 = vadd.f32 %v606, %v777
        %v779 = vpop.f32.mrb[0].mxu0
        %780 = vmatprep.mubr.f32.mxu0 0.0
        %v781 = vand.u32 %v636, 4294901760
        %v782 = vsub.f32 %v636, %v781
        %v783 = vand.u32 %v782, 4294901760
        %v784 = vsub.f32 %v782, %v783
        %v785 = vand.u32 %v784, 4294901760
        %786 = vmatmul.mubr.f32.gmra.mrb[0].mxu0 %v785
        %v787 = vpop.f32.mrb[0].mxu0
        %v788 = vadd.f32 %v611, %v787
        %v789 = vpop.f32.mrb[0].mxu0
        %790 = vdwg.mxu0
        %791 = vmatprep.subr.mxu0 0.0
        %v792 = vand.u32 %v549, 4294901760
        %v793 = vsub.f32 %v549, %v792
        %v794 = vand.u32 %v793, 4294901760
        %v795 = vsub.f32 %v793, %v794
        %v796 = vand.u32 %v795, 4294901760
        %797 = vmatpush1.msra.mxu0 %v796
        %798 = vmatprep.subr.mxu0 0.0
        %v799 = vand.u32 %v550, 4294901760
        %v800 = vsub.f32 %v550, %v799
        %v801 = vand.u32 %v800, 4294901760
        %v802 = vsub.f32 %v800, %v801
        %v803 = vand.u32 %v802, 4294901760
        %804 = vmatpush1.msra.mxu0 %v803
        %805 = vmatprep.subr.mxu0 0.0
        %v806 = vand.u32 %v551, 4294901760
        %v807 = vsub.f32 %v551, %v806
        %v808 = vand.u32 %v807, 4294901760
        %v809 = vsub.f32 %v807, %v808
        %v810 = vand.u32 %v809, 4294901760
        %811 = vmatpush1.msra.mxu0 %v810
        %812 = vmatprep.subr.mxu0 0.0
        %v813 = vand.u32 %v552, 4294901760
        %v814 = vsub.f32 %v552, %v813
        %v815 = vand.u32 %v814, 4294901760
        %v816 = vsub.f32 %v814, %v815
        %v817 = vand.u32 %v816, 4294901760
        %818 = vmatpush1.msra.mxu0 %v817
        %819 = vmatprep.subr.mxu0 0.0
        %v820 = vand.u32 %v553, 4294901760
        %v821 = vsub.f32 %v553, %v820
        %v822 = vand.u32 %v821, 4294901760
        %v823 = vsub.f32 %v821, %v822
        %v824 = vand.u32 %v823, 4294901760
        %825 = vmatpush1.msra.mxu0 %v824
        %826 = vmatprep.subr.mxu0 0.0
        %v827 = vand.u32 %v554, 4294901760
        %v828 = vsub.f32 %v554, %v827
        %v829 = vand.u32 %v828, 4294901760
        %v830 = vsub.f32 %v828, %v829
        %v831 = vand.u32 %v830, 4294901760
        %832 = vmatpush1.msra.mxu0 %v831
        %833 = vmatprep.subr.mxu0 0.0
        %v834 = vand.u32 %v555, 4294901760
        %v835 = vsub.f32 %v555, %v834
        %v836 = vand.u32 %v835, 4294901760
        %v837 = vsub.f32 %v835, %v836
        %v838 = vand.u32 %v837, 4294901760
        %839 = vmatpush1.msra.mxu0 %v838
        %840 = vmatprep.subr.mxu0 0.0
        %v841 = vand.u32 %v556, 4294901760
        %v842 = vsub.f32 %v556, %v841
        %v843 = vand.u32 %v842, 4294901760
        %v844 = vsub.f32 %v842, %v843
        %v845 = vand.u32 %v844, 4294901760
        %846 = vmatpush1.msra.mxu0 %v845
        %847 = vmatprep.subr.mxu0 0.0
        %848 = vmatpush1.msra.mxu0 0.0
        %849 = vmatprep.subr.mxu0 0.0
        %850 = vmatpush1.msra.mxu0 0.0
        %851 = vmatprep.subr.mxu0 0.0
        %852 = vmatpush1.msra.mxu0 0.0
        %853 = vmatprep.subr.mxu0 0.0
        %854 = vmatpush1.msra.mxu0 0.0
        %855 = vmatprep.subr.mxu0 0.0
        %856 = vmatpush1.msra.mxu0 0.0
        %857 = vmatprep.subr.mxu0 0.0
        %858 = vmatpush1.msra.mxu0 0.0
        %859 = vmatprep.subr.mxu0 0.0
        %860 = vmatpush1.msra.mxu0 0.0
        %861 = vmatprep.subr.mxu0 0.0
        %862 = vmatpush1.msra.mxu0 0.0
        %863 = vmatprep.subr.mxu0 0.0
        %864 = vmatpush1.msra.mxu0 0.0
        %865 = vmatprep.subr.mxu0 0.0
        %866 = vmatpush1.msra.mxu0 0.0
        %867 = vmatprep.subr.mxu0 0.0
        %868 = vmatpush1.msra.mxu0 0.0
        %869 = vmatprep.subr.mxu0 0.0
        %870 = vmatpush1.msra.mxu0 0.0
        %871 = vmatprep.subr.mxu0 0.0
        %872 = vmatpush1.msra.mxu0 0.0
        %873 = vmatprep.subr.mxu0 0.0
        %874 = vmatpush1.msra.mxu0 0.0
        %875 = vmatprep.subr.mxu0 0.0
        %876 = vmatpush1.msra.mxu0 0.0
        %877 = vmatprep.subr.mxu0 0.0
        %878 = vmatpush1.msra.mxu0 0.0
        %879 = vmatprep.subr.mxu0 0.0
        %880 = vmatpush1.msra.mxu0 0.0
        %881 = vmatprep.subr.mxu0 0.0
        %882 = vmatpush1.msra.mxu0 0.0
        %883 = vmatprep.subr.mxu0 0.0
        %884 = vmatpush1.msra.mxu0 0.0
        %885 = vmatprep.subr.mxu0 0.0
        %886 = vmatpush1.msra.mxu0 0.0
        %887 = vmatprep.subr.mxu0 0.0
        %888 = vmatpush1.msra.mxu0 0.0
        %889 = vmatprep.subr.mxu0 0.0
        %890 = vmatpush1.msra.mxu0 0.0
        %891 = vmatprep.subr.mxu0 0.0
        %892 = vmatpush1.msra.mxu0 0.0
        %893 = vmatprep.subr.mxu0 0.0
        %894 = vmatpush1.msra.mxu0 0.0
        %895 = vmatprep.mubr.f32.mxu0 0.0
        %v896 = vand.u32 %v615, 4294901760
        %897 = vmatmul.mubr.f32.gmra.mrb[0].mxu0 %v896
        %v898 = vpop.f32.mrb[0].mxu0
        %v899 = vadd.f32 %v718, %v898
        %v900 = vpop.f32.mrb[0].mxu0
        %901 = vmatprep.mubr.f32.mxu0 0.0
        %v902 = vand.u32 %v618, 4294901760
        %903 = vmatmul.mubr.f32.gmra.mrb[0].mxu0 %v902
        %v904 = vpop.f32.mrb[0].mxu0
        %v905 = vadd.f32 %v728, %v904
        %v906 = vpop.f32.mrb[0].mxu0
        %907 = vmatprep.mubr.f32.mxu0 0.0
        %v908 = vand.u32 %v621, 4294901760
        %909 = vmatmul.mubr.f32.gmra.mrb[0].mxu0 %v908
        %v910 = vpop.f32.mrb[0].mxu0
        %v911 = vadd.f32 %v738, %v910
        %v912 = vpop.f32.mrb[0].mxu0
        %913 = vmatprep.mubr.f32.mxu0 0.0
        %v914 = vand.u32 %v624, 4294901760
        %915 = vmatmul.mubr.f32.gmra.mrb[0].mxu0 %v914
        %v916 = vpop.f32.mrb[0].mxu0
        %v917 = vadd.f32 %v748, %v916
        %v918 = vpop.f32.mrb[0].mxu0
        %919 = vmatprep.mubr.f32.mxu0 0.0
        %v920 = vand.u32 %v627, 4294901760
        %921 = vmatmul.mubr.f32.gmra.mrb[0].mxu0 %v920
        %v922 = vpop.f32.mrb[0].mxu0
        %v923 = vadd.f32 %v758, %v922
        %v924 = vpop.f32.mrb[0].mxu0
        %925 = vmatprep.mubr.f32.mxu0 0.0
        %v926 = vand.u32 %v630, 4294901760
        %927 = vmatmul.mubr.f32.gmra.mrb[0].mxu0 %v926
        %v928 = vpop.f32.mrb[0].mxu0
        %v929 = vadd.f32 %v768, %v928
        %v930 = vpop.f32.mrb[0].mxu0
        %931 = vmatprep.mubr.f32.mxu0 0.0
        %v932 = vand.u32 %v633, 4294901760
        %933 = vmatmul.mubr.f32.gmra.mrb[0].mxu0 %v932
        %v934 = vpop.f32.mrb[0].mxu0
        %v935 = vadd.f32 %v778, %v934
        %v936 = vpop.f32.mrb[0].mxu0
        %937 = vmatprep.mubr.f32.mxu0 0.0
        %v938 = vand.u32 %v636, 4294901760
        %939 = vmatmul.mubr.f32.gmra.mrb[0].mxu0 %v938
        %v940 = vpop.f32.mrb[0].mxu0
        %v941 = vadd.f32 %v788, %v940
        %v942 = vpop.f32.mrb[0].mxu0
        %943 = vdwg.mxu0
        %944 = vmatprep.subr.mxu0 0.0
        %v945 = vand.u32 %v549, 4294901760
        %v946 = vsub.f32 %v549, %v945
        %947 = vmatpush1.msra.mxu0 %v946
        %948 = vmatprep.subr.mxu0 0.0
        %v949 = vand.u32 %v550, 4294901760
        %v950 = vsub.f32 %v550, %v949
        %951 = vmatpush1.msra.mxu0 %v950
        %952 = vmatprep.subr.mxu0 0.0
        %v953 = vand.u32 %v551, 4294901760
        %v954 = vsub.f32 %v551, %v953
        %955 = vmatpush1.msra.mxu0 %v954
        %956 = vmatprep.subr.mxu0 0.0
        %v957 = vand.u32 %v552, 4294901760
        %v958 = vsub.f32 %v552, %v957
        %959 = vmatpush1.msra.mxu0 %v958
        %960 = vmatprep.subr.mxu0 0.0
        %v961 = vand.u32 %v553, 4294901760
        %v962 = vsub.f32 %v553, %v961
        %963 = vmatpush1.msra.mxu0 %v962
        %964 = vmatprep.subr.mxu0 0.0
        %v965 = vand.u32 %v554, 4294901760
        %v966 = vsub.f32 %v554, %v965
        %967 = vmatpush1.msra.mxu0 %v966
        %968 = vmatprep.subr.mxu0 0.0
        %v969 = vand.u32 %v555, 4294901760
        %v970 = vsub.f32 %v555, %v969
        %971 = vmatpush1.msra.mxu0 %v970
        %972 = vmatprep.subr.mxu0 0.0
        %v973 = vand.u32 %v556, 4294901760
        %v974 = vsub.f32 %v556, %v973
        %975 = vmatpush1.msra.mxu0 %v974
        %976 = vmatprep.subr.mxu0 0.0
        %977 = vmatpush1.msra.mxu0 0.0
        %978 = vmatprep.subr.mxu0 0.0
        %979 = vmatpush1.msra.mxu0 0.0
        %980 = vmatprep.subr.mxu0 0.0
        %981 = vmatpush1.msra.mxu0 0.0
        %982 = vmatprep.subr.mxu0 0.0
        %983 = vmatpush1.msra.mxu0 0.0
        %984 = vmatprep.subr.mxu0 0.0
        %985 = vmatpush1.msra.mxu0 0.0
        %986 = vmatprep.subr.mxu0 0.0
        %987 = vmatpush1.msra.mxu0 0.0
        %988 = vmatprep.subr.mxu0 0.0
        %989 = vmatpush1.msra.mxu0 0.0
        %990 = vmatprep.subr.mxu0 0.0
        %991 = vmatpush1.msra.mxu0 0.0
        %992 = vmatprep.subr.mxu0 0.0
        %993 = vmatpush1.msra.mxu0 0.0
        %994 = vmatprep.subr.mxu0 0.0
        %995 = vmatpush1.msra.mxu0 0.0
        %996 = vmatprep.subr.mxu0 0.0
        %997 = vmatpush1.msra.mxu0 0.0
        %998 = vmatprep.subr.mxu0 0.0
        %999 = vmatpush1.msra.mxu0 0.0
        %1000 = vmatprep.subr.mxu0 0.0
        %1001 = vmatpush1.msra.mxu0 0.0
        %1002 = vmatprep.subr.mxu0 0.0
        %1003 = vmatpush1.msra.mxu0 0.0
        %1004 = vmatprep.subr.mxu0 0.0
        %1005 = vmatpush1.msra.mxu0 0.0
        %1006 = vmatprep.subr.mxu0 0.0
        %1007 = vmatpush1.msra.mxu0 0.0
        %1008 = vmatprep.subr.mxu0 0.0
        %1009 = vmatpush1.msra.mxu0 0.0
        %1010 = vmatprep.subr.mxu0 0.0
        %1011 = vmatpush1.msra.mxu0 0.0
        %1012 = vmatprep.subr.mxu0 0.0
        %1013 = vmatpush1.msra.mxu0 0.0
        %1014 = vmatprep.subr.mxu0 0.0
        %1015 = vmatpush1.msra.mxu0 0.0
        %1016 = vmatprep.subr.mxu0 0.0
        %1017 = vmatpush1.msra.mxu0 0.0
        %1018 = vmatprep.subr.mxu0 0.0
        %1019 = vmatpush1.msra.mxu0 0.0
        %1020 = vmatprep.subr.mxu0 0.0
        %1021 = vmatpush1.msra.mxu0 0.0
        %1022 = vmatprep.subr.mxu0 0.0
        %1023 = vmatpush1.msra.mxu0 0.0
        %1024 = vmatprep.mubr.f32.mxu0 0.0
        %v1025 = vand.u32 %v615, 4294901760
        %v1026 = vsub.f32 %v615, %v1025
        %1027 = vmatmul.mubr.f32.gmra.mrb[0].mxu0 %v1026
        %v1028 = vpop.f32.mrb[0].mxu0
        %v1029 = vadd.f32 %v899, %v1028
        %v1030 = vpop.f32.mrb[0].mxu0
        %1031 = vmatprep.mubr.f32.mxu0 0.0
        %v1032 = vand.u32 %v618, 4294901760
        %v1033 = vsub.f32 %v618, %v1032
        %1034 = vmatmul.mubr.f32.gmra.mrb[0].mxu0 %v1033
        %v1035 = vpop.f32.mrb[0].mxu0
        %v1036 = vadd.f32 %v905, %v1035
        %v1037 = vpop.f32.mrb[0].mxu0
        %1038 = vmatprep.mubr.f32.mxu0 0.0
        %v1039 = vand.u32 %v621, 4294901760
        %v1040 = vsub.f32 %v621, %v1039
        %1041 = vmatmul.mubr.f32.gmra.mrb[0].mxu0 %v1040
        %v1042 = vpop.f32.mrb[0].mxu0
        %v1043 = vadd.f32 %v911, %v1042
        %v1044 = vpop.f32.mrb[0].mxu0
        %1045 = vmatprep.mubr.f32.mxu0 0.0
        %v1046 = vand.u32 %v624, 4294901760
        %v1047 = vsub.f32 %v624, %v1046
        %1048 = vmatmul.mubr.f32.gmra.mrb[0].mxu0 %v1047
        %v1049 = vpop.f32.mrb[0].mxu0
        %v1050 = vadd.f32 %v917, %v1049
        %v1051 = vpop.f32.mrb[0].mxu0
        %1052 = vmatprep.mubr.f32.mxu0 0.0
        %v1053 = vand.u32 %v627, 4294901760
        %v1054 = vsub.f32 %v627, %v1053
        %1055 = vmatmul.mubr.f32.gmra.mrb[0].mxu0 %v1054
        %v1056 = vpop.f32.mrb[0].mxu0
        %v1057 = vadd.f32 %v923, %v1056
        %v1058 = vpop.f32.mrb[0].mxu0
        %1059 = vmatprep.mubr.f32.mxu0 0.0
        %v1060 = vand.u32 %v630, 4294901760
        %v1061 = vsub.f32 %v630, %v1060
        %1062 = vmatmul.mubr.f32.gmra.mrb[0].mxu0 %v1061
        %v1063 = vpop.f32.mrb[0].mxu0
        %v1064 = vadd.f32 %v929, %v1063
        %v1065 = vpop.f32.mrb[0].mxu0
        %1066 = vmatprep.mubr.f32.mxu0 0.0
        %v1067 = vand.u32 %v633, 4294901760
        %v1068 = vsub.f32 %v633, %v1067
        %1069 = vmatmul.mubr.f32.gmra.mrb[0].mxu0 %v1068
        %v1070 = vpop.f32.mrb[0].mxu0
        %v1071 = vadd.f32 %v935, %v1070
        %v1072 = vpop.f32.mrb[0].mxu0
        %1073 = vmatprep.mubr.f32.mxu0 0.0
        %v1074 = vand.u32 %v636, 4294901760
        %v1075 = vsub.f32 %v636, %v1074
        %1076 = vmatmul.mubr.f32.gmra.mrb[0].mxu0 %v1075
        %v1077 = vpop.f32.mrb[0].mxu0
        %v1078 = vadd.f32 %v941, %v1077
        %v1079 = vpop.f32.mrb[0].mxu0
        %1080 = vdwg.mxu0
        %1081 = vmatprep.subr.mxu0 0.0
        %v1082 = vand.u32 %v549, 4294901760
        %1083 = vmatpush1.msra.mxu0 %v1082
        %1084 = vmatprep.subr.mxu0 0.0
        %v1085 = vand.u32 %v550, 4294901760
        %1086 = vmatpush1.msra.mxu0 %v1085
        %1087 = vmatprep.subr.mxu0 0.0
        %v1088 = vand.u32 %v551, 4294901760
        %1089 = vmatpush1.msra.mxu0 %v1088
        %1090 = vmatprep.subr.mxu0 0.0
        %v1091 = vand.u32 %v552, 4294901760
        %1092 = vmatpush1.msra.mxu0 %v1091
        %1093 = vmatprep.subr.mxu0 0.0
        %v1094 = vand.u32 %v553, 4294901760
        %1095 = vmatpush1.msra.mxu0 %v1094
        %1096 = vmatprep.subr.mxu0 0.0
        %v1097 = vand.u32 %v554, 4294901760
        %1098 = vmatpush1.msra.mxu0 %v1097
        %1099 = vmatprep.subr.mxu0 0.0
        %v1100 = vand.u32 %v555, 4294901760
        %1101 = vmatpush1.msra.mxu0 %v1100
        %1102 = vmatprep.subr.mxu0 0.0
        %v1103 = vand.u32 %v556, 4294901760
        %1104 = vmatpush1.msra.mxu0 %v1103
        %1105 = vmatprep.subr.mxu0 0.0
        %1106 = vmatpush1.msra.mxu0 0.0
        %1107 = vmatprep.subr.mxu0 0.0
        %1108 = vmatpush1.msra.mxu0 0.0
        %1109 = vmatprep.subr.mxu0 0.0
        %1110 = vmatpush1.msra.mxu0 0.0
        %1111 = vmatprep.subr.mxu0 0.0
        %1112 = vmatpush1.msra.mxu0 0.0
        %1113 = vmatprep.subr.mxu0 0.0
        %1114 = vmatpush1.msra.mxu0 0.0
        %1115 = vmatprep.subr.mxu0 0.0
        %1116 = vmatpush1.msra.mxu0 0.0
        %1117 = vmatprep.subr.mxu0 0.0
        %1118 = vmatpush1.msra.mxu0 0.0
        %1119 = vmatprep.subr.mxu0 0.0
        %1120 = vmatpush1.msra.mxu0 0.0
        %1121 = vmatprep.subr.mxu0 0.0
        %1122 = vmatpush1.msra.mxu0 0.0
        %1123 = vmatprep.subr.mxu0 0.0
        %1124 = vmatpush1.msra.mxu0 0.0
        %1125 = vmatprep.subr.mxu0 0.0
        %1126 = vmatpush1.msra.mxu0 0.0
        %1127 = vmatprep.subr.mxu0 0.0
        %1128 = vmatpush1.msra.mxu0 0.0
        %1129 = vmatprep.subr.mxu0 0.0
        %1130 = vmatpush1.msra.mxu0 0.0
        %1131 = vmatprep.subr.mxu0 0.0
        %1132 = vmatpush1.msra.mxu0 0.0
        %1133 = vmatprep.subr.mxu0 0.0
        %1134 = vmatpush1.msra.mxu0 0.0
        %1135 = vmatprep.subr.mxu0 0.0
        %1136 = vmatpush1.msra.mxu0 0.0
        %1137 = vmatprep.subr.mxu0 0.0
        %1138 = vmatpush1.msra.mxu0 0.0
        %1139 = vmatprep.subr.mxu0 0.0
        %1140 = vmatpush1.msra.mxu0 0.0
        %1141 = vmatprep.subr.mxu0 0.0
        %1142 = vmatpush1.msra.mxu0 0.0
        %1143 = vmatprep.subr.mxu0 0.0
        %1144 = vmatpush1.msra.mxu0 0.0
        %1145 = vmatprep.subr.mxu0 0.0
        %1146 = vmatpush1.msra.mxu0 0.0
        %1147 = vmatprep.subr.mxu0 0.0
        %1148 = vmatpush1.msra.mxu0 0.0
        %1149 = vmatprep.subr.mxu0 0.0
        %1150 = vmatpush1.msra.mxu0 0.0
        %1151 = vmatprep.subr.mxu0 0.0
        %1152 = vmatpush1.msra.mxu0 0.0
        %1153 = vmatprep.mubr.f32.mxu0 0.0
        %v1154 = vand.u32 %v615, 4294901760
        %v1155 = vsub.f32 %v615, %v1154
        %v1156 = vand.u32 %v1155, 4294901760
        %1157 = vmatmul.mubr.f32.gmra.mrb[0].mxu0 %v1156
        %v1158 = vpop.f32.mrb[0].mxu0
        %v1159 = vadd.f32 %v1029, %v1158
        %v1160 = vpop.f32.mrb[0].mxu0
        %1161 = vmatprep.mubr.f32.mxu0 0.0
        %v1162 = vand.u32 %v618, 4294901760
        %v1163 = vsub.f32 %v618, %v1162
        %v1164 = vand.u32 %v1163, 4294901760
        %1165 = vmatmul.mubr.f32.gmra.mrb[0].mxu0 %v1164
        %v1166 = vpop.f32.mrb[0].mxu0
        %v1167 = vadd.f32 %v1036, %v1166
        %v1168 = vpop.f32.mrb[0].mxu0
        %1169 = vmatprep.mubr.f32.mxu0 0.0
        %v1170 = vand.u32 %v621, 4294901760
        %v1171 = vsub.f32 %v621, %v1170
        %v1172 = vand.u32 %v1171, 4294901760
        %1173 = vmatmul.mubr.f32.gmra.mrb[0].mxu0 %v1172
        %v1174 = vpop.f32.mrb[0].mxu0
        %v1175 = vadd.f32 %v1043, %v1174
        %v1176 = vpop.f32.mrb[0].mxu0
        %1177 = vmatprep.mubr.f32.mxu0 0.0
        %v1178 = vand.u32 %v624, 4294901760
        %v1179 = vsub.f32 %v624, %v1178
        %v1180 = vand.u32 %v1179, 4294901760
        %1181 = vmatmul.mubr.f32.gmra.mrb[0].mxu0 %v1180
        %v1182 = vpop.f32.mrb[0].mxu0
        %v1183 = vadd.f32 %v1050, %v1182
        %v1184 = vpop.f32.mrb[0].mxu0
        %1185 = vmatprep.mubr.f32.mxu0 0.0
        %v1186 = vand.u32 %v627, 4294901760
        %v1187 = vsub.f32 %v627, %v1186
        %v1188 = vand.u32 %v1187, 4294901760
        %1189 = vmatmul.mubr.f32.gmra.mrb[0].mxu0 %v1188
        %v1190 = vpop.f32.mrb[0].mxu0
        %v1191 = vadd.f32 %v1057, %v1190
        %v1192 = vpop.f32.mrb[0].mxu0
        %1193 = vmatprep.mubr.f32.mxu0 0.0
        %v1194 = vand.u32 %v630, 4294901760
        %v1195 = vsub.f32 %v630, %v1194
        %v1196 = vand.u32 %v1195, 4294901760
        %1197 = vmatmul.mubr.f32.gmra.mrb[0].mxu0 %v1196
        %v1198 = vpop.f32.mrb[0].mxu0
        %v1199 = vadd.f32 %v1064, %v1198
        %v1200 = vpop.f32.mrb[0].mxu0
        %1201 = vmatprep.mubr.f32.mxu0 0.0
        %v1202 = vand.u32 %v633, 4294901760
        %v1203 = vsub.f32 %v633, %v1202
        %v1204 = vand.u32 %v1203, 4294901760
        %1205 = vmatmul.mubr.f32.gmra.mrb[0].mxu0 %v1204
        %v1206 = vpop.f32.mrb[0].mxu0
        %v1207 = vadd.f32 %v1071, %v1206
        %v1208 = vpop.f32.mrb[0].mxu0
        %1209 = vmatprep.mubr.f32.mxu0 0.0
        %v1210 = vand.u32 %v636, 4294901760
        %v1211 = vsub.f32 %v636, %v1210
        %v1212 = vand.u32 %v1211, 4294901760
        %1213 = vmatmul.mubr.f32.gmra.mrb[0].mxu0 %v1212
        %v1214 = vpop.f32.mrb[0].mxu0
        %v1215 = vadd.f32 %v1078, %v1214
        %v1216 = vpop.f32.mrb[0].mxu0
        %1217 = vdwg.mxu0
        %1218 = vmatprep.subr.mxu0 0.0
        %v1219 = vand.u32 %v549, 4294901760
        %v1220 = vsub.f32 %v549, %v1219
        %v1221 = vand.u32 %v1220, 4294901760
        %1222 = vmatpush1.msra.mxu0 %v1221
        %1223 = vmatprep.subr.mxu0 0.0
        %v1224 = vand.u32 %v550, 4294901760
        %v1225 = vsub.f32 %v550, %v1224
        %v1226 = vand.u32 %v1225, 4294901760
        %1227 = vmatpush1.msra.mxu0 %v1226
        %1228 = vmatprep.subr.mxu0 0.0
        %v1229 = vand.u32 %v551, 4294901760
        %v1230 = vsub.f32 %v551, %v1229
        %v1231 = vand.u32 %v1230, 4294901760
        %1232 = vmatpush1.msra.mxu0 %v1231
        %1233 = vmatprep.subr.mxu0 0.0
        %v1234 = vand.u32 %v552, 4294901760
        %v1235 = vsub.f32 %v552, %v1234
        %v1236 = vand.u32 %v1235, 4294901760
        %1237 = vmatpush1.msra.mxu0 %v1236
        %1238 = vmatprep.subr.mxu0 0.0
        %v1239 = vand.u32 %v553, 4294901760
        %v1240 = vsub.f32 %v553, %v1239
        %v1241 = vand.u32 %v1240, 4294901760
        %1242 = vmatpush1.msra.mxu0 %v1241
        %1243 = vmatprep.subr.mxu0 0.0
        %v1244 = vand.u32 %v554, 4294901760
        %v1245 = vsub.f32 %v554, %v1244
        %v1246 = vand.u32 %v1245, 4294901760
        %1247 = vmatpush1.msra.mxu0 %v1246
        %1248 = vmatprep.subr.mxu0 0.0
        %v1249 = vand.u32 %v555, 4294901760
        %v1250 = vsub.f32 %v555, %v1249
        %v1251 = vand.u32 %v1250, 4294901760
        %1252 = vmatpush1.msra.mxu0 %v1251
        %1253 = vmatprep.subr.mxu0 0.0
        %v1254 = vand.u32 %v556, 4294901760
        %v1255 = vsub.f32 %v556, %v1254
        %v1256 = vand.u32 %v1255, 4294901760
        %1257 = vmatpush1.msra.mxu0 %v1256
        %1258 = vmatprep.subr.mxu0 0.0
        %1259 = vmatpush1.msra.mxu0 0.0
        %1260 = vmatprep.subr.mxu0 0.0
        %1261 = vmatpush1.msra.mxu0 0.0
        %1262 = vmatprep.subr.mxu0 0.0
        %1263 = vmatpush1.msra.mxu0 0.0
        %1264 = vmatprep.subr.mxu0 0.0
        %1265 = vmatpush1.msra.mxu0 0.0
        %1266 = vmatprep.subr.mxu0 0.0
        %1267 = vmatpush1.msra.mxu0 0.0
        %1268 = vmatprep.subr.mxu0 0.0
        %1269 = vmatpush1.msra.mxu0 0.0
        %1270 = vmatprep.subr.mxu0 0.0
        %1271 = vmatpush1.msra.mxu0 0.0
        %1272 = vmatprep.subr.mxu0 0.0
        %1273 = vmatpush1.msra.mxu0 0.0
        %1274 = vmatprep.subr.mxu0 0.0
        %1275 = vmatpush1.msra.mxu0 0.0
        %1276 = vmatprep.subr.mxu0 0.0
        %1277 = vmatpush1.msra.mxu0 0.0
        %1278 = vmatprep.subr.mxu0 0.0
        %1279 = vmatpush1.msra.mxu0 0.0
        %1280 = vmatprep.subr.mxu0 0.0
        %1281 = vmatpush1.msra.mxu0 0.0
        %1282 = vmatprep.subr.mxu0 0.0
        %1283 = vmatpush1.msra.mxu0 0.0
        %1284 = vmatprep.subr.mxu0 0.0
        %1285 = vmatpush1.msra.mxu0 0.0
        %1286 = vmatprep.subr.mxu0 0.0
        %1287 = vmatpush1.msra.mxu0 0.0
        %1288 = vmatprep.subr.mxu0 0.0
        %1289 = vmatpush1.msra.mxu0 0.0
        %1290 = vmatprep.subr.mxu0 0.0
        %1291 = vmatpush1.msra.mxu0 0.0
        %1292 = vmatprep.subr.mxu0 0.0
        %1293 = vmatpush1.msra.mxu0 0.0
        %1294 = vmatprep.subr.mxu0 0.0
        %1295 = vmatpush1.msra.mxu0 0.0
        %1296 = vmatprep.subr.mxu0 0.0
        %1297 = vmatpush1.msra.mxu0 0.0
        %1298 = vmatprep.subr.mxu0 0.0
        %1299 = vmatpush1.msra.mxu0 0.0
        %1300 = vmatprep.subr.mxu0 0.0
        %1301 = vmatpush1.msra.mxu0 0.0
        %1302 = vmatprep.subr.mxu0 0.0
        %1303 = vmatpush1.msra.mxu0 0.0
        %1304 = vmatprep.subr.mxu0 0.0
        %1305 = vmatpush1.msra.mxu0 0.0
        %1306 = vmatprep.mubr.f32.mxu0 0.0
        %v1307 = vand.u32 %v615, 4294901760
        %1308 = vmatmul.mubr.f32.gmra.mrb[0].mxu0 %v1307
        %v1309 = vpop.f32.mrb[0].mxu0
        %v1310 = vadd.f32 %v1159, %v1309
        %v1311 = vpop.f32.mrb[0].mxu0
        %1312 = vmatprep.mubr.f32.mxu0 0.0
        %v1313 = vand.u32 %v618, 4294901760
        %1314 = vmatmul.mubr.f32.gmra.mrb[0].mxu0 %v1313
        %v1315 = vpop.f32.mrb[0].mxu0
        %v1316 = vadd.f32 %v1167, %v1315
        %v1317 = vpop.f32.mrb[0].mxu0
        %1318 = vmatprep.mubr.f32.mxu0 0.0
        %v1319 = vand.u32 %v621, 4294901760
        %1320 = vmatmul.mubr.f32.gmra.mrb[0].mxu0 %v1319
        %v1321 = vpop.f32.mrb[0].mxu0
        %v1322 = vadd.f32 %v1175, %v1321
        %v1323 = vpop.f32.mrb[0].mxu0
        %1324 = vmatprep.mubr.f32.mxu0 0.0
        %v1325 = vand.u32 %v624, 4294901760
        %1326 = vmatmul.mubr.f32.gmra.mrb[0].mxu0 %v1325
        %v1327 = vpop.f32.mrb[0].mxu0
        %v1328 = vadd.f32 %v1183, %v1327
        %v1329 = vpop.f32.mrb[0].mxu0
        %1330 = vmatprep.mubr.f32.mxu0 0.0
        %v1331 = vand.u32 %v627, 4294901760
        %1332 = vmatmul.mubr.f32.gmra.mrb[0].mxu0 %v1331
        %v1333 = vpop.f32.mrb[0].mxu0
        %v1334 = vadd.f32 %v1191, %v1333
        %v1335 = vpop.f32.mrb[0].mxu0
        %1336 = vmatprep.mubr.f32.mxu0 0.0
        %v1337 = vand.u32 %v630, 4294901760
        %1338 = vmatmul.mubr.f32.gmra.mrb[0].mxu0 %v1337
        %v1339 = vpop.f32.mrb[0].mxu0
        %v1340 = vadd.f32 %v1199, %v1339
        %v1341 = vpop.f32.mrb[0].mxu0
        %1342 = vmatprep.mubr.f32.mxu0 0.0
        %v1343 = vand.u32 %v633, 4294901760
        %1344 = vmatmul.mubr.f32.gmra.mrb[0].mxu0 %v1343
        %v1345 = vpop.f32.mrb[0].mxu0
        %v1346 = vadd.f32 %v1207, %v1345
        %v1347 = vpop.f32.mrb[0].mxu0
        %1348 = vmatprep.mubr.f32.mxu0 0.0
        %v1349 = vand.u32 %v636, 4294901760
        %1350 = vmatmul.mubr.f32.gmra.mrb[0].mxu0 %v1349
        %v1351 = vpop.f32.mrb[0].mxu0
        %v1352 = vadd.f32 %v1215, %v1351
        %v1353 = vpop.f32.mrb[0].mxu0
        %1354 = vdwg.mxu0
        %1355 = vmatprep.subr.mxu0 0.0
        %v1356 = vand.u32 %v549, 4294901760
        %1357 = vmatpush1.msra.mxu0 %v1356
        %1358 = vmatprep.subr.mxu0 0.0
        %v1359 = vand.u32 %v550, 4294901760
        %1360 = vmatpush1.msra.mxu0 %v1359
        %1361 = vmatprep.subr.mxu0 0.0
        %v1362 = vand.u32 %v551, 4294901760
        %1363 = vmatpush1.msra.mxu0 %v1362
        %1364 = vmatprep.subr.mxu0 0.0
        %v1365 = vand.u32 %v552, 4294901760
        %1366 = vmatpush1.msra.mxu0 %v1365
        %1367 = vmatprep.subr.mxu0 0.0
        %v1368 = vand.u32 %v553, 4294901760
        %1369 = vmatpush1.msra.mxu0 %v1368
        %1370 = vmatprep.subr.mxu0 0.0
        %v1371 = vand.u32 %v554, 4294901760
        %1372 = vmatpush1.msra.mxu0 %v1371
        %1373 = vmatprep.subr.mxu0 0.0
        %v1374 = vand.u32 %v555, 4294901760
        %1375 = vmatpush1.msra.mxu0 %v1374
        %1376 = vmatprep.subr.mxu0 0.0
        %v1377 = vand.u32 %v556, 4294901760
        %1378 = vmatpush1.msra.mxu0 %v1377
        %1379 = vmatprep.subr.mxu0 0.0
        %1380 = vmatpush1.msra.mxu0 0.0
        %1381 = vmatprep.subr.mxu0 0.0
        %1382 = vmatpush1.msra.mxu0 0.0
        %1383 = vmatprep.subr.mxu0 0.0
        %1384 = vmatpush1.msra.mxu0 0.0
        %1385 = vmatprep.subr.mxu0 0.0
        %1386 = vmatpush1.msra.mxu0 0.0
        %1387 = vmatprep.subr.mxu0 0.0
        %1388 = vmatpush1.msra.mxu0 0.0
        %1389 = vmatprep.subr.mxu0 0.0
        %1390 = vmatpush1.msra.mxu0 0.0
        %1391 = vmatprep.subr.mxu0 0.0
        %1392 = vmatpush1.msra.mxu0 0.0
        %1393 = vmatprep.subr.mxu0 0.0
        %1394 = vmatpush1.msra.mxu0 0.0
        %1395 = vmatprep.subr.mxu0 0.0
        %1396 = vmatpush1.msra.mxu0 0.0
        %1397 = vmatprep.subr.mxu0 0.0
        %1398 = vmatpush1.msra.mxu0 0.0
        %1399 = vmatprep.subr.mxu0 0.0
        %1400 = vmatpush1.msra.mxu0 0.0
        %1401 = vmatprep.subr.mxu0 0.0
        %1402 = vmatpush1.msra.mxu0 0.0
        %1403 = vmatprep.subr.mxu0 0.0
        %1404 = vmatpush1.msra.mxu0 0.0
        %1405 = vmatprep.subr.mxu0 0.0
        %1406 = vmatpush1.msra.mxu0 0.0
        %1407 = vmatprep.subr.mxu0 0.0
        %1408 = vmatpush1.msra.mxu0 0.0
        %1409 = vmatprep.subr.mxu0 0.0
        %1410 = vmatpush1.msra.mxu0 0.0
        %1411 = vmatprep.subr.mxu0 0.0
        %1412 = vmatpush1.msra.mxu0 0.0
        %1413 = vmatprep.subr.mxu0 0.0
        %1414 = vmatpush1.msra.mxu0 0.0
        %1415 = vmatprep.subr.mxu0 0.0
        %1416 = vmatpush1.msra.mxu0 0.0
        %1417 = vmatprep.subr.mxu0 0.0
        %1418 = vmatpush1.msra.mxu0 0.0
        %1419 = vmatprep.subr.mxu0 0.0
        %1420 = vmatpush1.msra.mxu0 0.0
        %1421 = vmatprep.subr.mxu0 0.0
        %1422 = vmatpush1.msra.mxu0 0.0
        %1423 = vmatprep.subr.mxu0 0.0
        %1424 = vmatpush1.msra.mxu0 0.0
        %1425 = vmatprep.subr.mxu0 0.0
        %1426 = vmatpush1.msra.mxu0 0.0
        %1427 = vmatprep.mubr.f32.mxu0 0.0
        %v1428 = vand.u32 %v615, 4294901760
        %1429 = vmatmul.mubr.f32.gmra.mrb[0].mxu0 %v1428
        %v1430 = vpop.f32.mrb[0].mxu0
        %v1431 = vadd.f32 %v1310, %v1430
        %v1432 = vpop.f32.mrb[0].mxu0
        %1433 = vmatprep.mubr.f32.mxu0 0.0
        %v1434 = vand.u32 %v618, 4294901760
        %1435 = vmatmul.mubr.f32.gmra.mrb[0].mxu0 %v1434
        %v1436 = vpop.f32.mrb[0].mxu0
        %v1437 = vadd.f32 %v1316, %v1436
        %v1438 = vpop.f32.mrb[0].mxu0
        %1439 = vmatprep.mubr.f32.mxu0 0.0
        %v1440 = vand.u32 %v621, 4294901760
        %1441 = vmatmul.mubr.f32.gmra.mrb[0].mxu0 %v1440
        %v1442 = vpop.f32.mrb[0].mxu0
        %v1443 = vadd.f32 %v1322, %v1442
        %v1444 = vpop.f32.mrb[0].mxu0
        %1445 = vmatprep.mubr.f32.mxu0 0.0
        %v1446 = vand.u32 %v624, 4294901760
        %1447 = vmatmul.mubr.f32.gmra.mrb[0].mxu0 %v1446
        %v1448 = vpop.f32.mrb[0].mxu0
        %v1449 = vadd.f32 %v1328, %v1448
        %v1450 = vpop.f32.mrb[0].mxu0
        %1451 = vmatprep.mubr.f32.mxu0 0.0
        %v1452 = vand.u32 %v627, 4294901760
        %1453 = vmatmul.mubr.f32.gmra.mrb[0].mxu0 %v1452
        %v1454 = vpop.f32.mrb[0].mxu0
        %v1455 = vadd.f32 %v1334, %v1454
        %v1456 = vpop.f32.mrb[0].mxu0
        %1457 = vmatprep.mubr.f32.mxu0 0.0
        %v1458 = vand.u32 %v630, 4294901760
        %1459 = vmatmul.mubr.f32.gmra.mrb[0].mxu0 %v1458
        %v1460 = vpop.f32.mrb[0].mxu0
        %v1461 = vadd.f32 %v1340, %v1460
        %v1462 = vpop.f32.mrb[0].mxu0
        %1463 = vmatprep.mubr.f32.mxu0 0.0
        %v1464 = vand.u32 %v633, 4294901760
        %1465 = vmatmul.mubr.f32.gmra.mrb[0].mxu0 %v1464
        %v1466 = vpop.f32.mrb[0].mxu0
        %v1467 = vadd.f32 %v1346, %v1466
        %v1468 = vpop.f32.mrb[0].mxu0
        %1469 = vmatprep.mubr.f32.mxu0 0.0
        %v1470 = vand.u32 %v636, 4294901760
        %1471 = vmatmul.mubr.f32.gmra.mrb[0].mxu0 %v1470
        %v1472 = vpop.f32.mrb[0].mxu0
        %v1473 = vadd.f32 %v1352, %v1472
        %v1474 = vpop.f32.mrb[0].mxu0
        %1475 = vdwg.mxu0
        %v1476 = vtanh.pop %v1431
        %v1477 = vtanh.pop %v1437
        %v1478 = vtanh.pop %v1443
        %v1479 = vtanh.pop %v1449
        %v1480 = vtanh.pop %v1455
        %v1481 = vtanh.pop %v1461
        %v1482 = vtanh.pop %v1467
        %v1483 = vtanh.pop %v1473
        %v1484 = vld [vmem:[%s5] sm:$0xff]
        %v1485 = vld [vmem:[%s5 + $0x8] sm:$0xff]
        %v1486 = vld [vmem:[%s5 + $0x10] sm:$0xff]
        %v1487 = vld [vmem:[%s5 + $0x18] sm:$0xff]
        %v1488 = vld [vmem:[%s5 + $0x20] sm:$0xff]
        %v1489 = vld [vmem:[%s5 + $0x28] sm:$0xff]
        %v1490 = vld [vmem:[%s5 + $0x30] sm:$0xff]
        %v1491 = vld [vmem:[%s5 + $0x38] sm:$0xff]
        %v1492 = vld [vmem:[%s6] sm:$0xff]
        %v1493 = vld [vmem:[%s6 + $0x8] sm:$0xff]
        %v1494 = vld [vmem:[%s6 + $0x10] sm:$0xff]
        %v1495 = vld [vmem:[%s6 + $0x18] sm:$0xff]
        %v1496 = vld [vmem:[%s6 + $0x20] sm:$0xff]
        %v1497 = vld [vmem:[%s6 + $0x28] sm:$0xff]
        %v1498 = vld [vmem:[%s6 + $0x30] sm:$0xff]
        %v1499 = vld [vmem:[%s6 + $0x38] sm:$0xff]
        %1501 = vset.pattern.permute.xlu0 0
        %1502 = vperm.xlu0 %1501, %v1492
        %v1503 = vpop.permute.xlu0 %1502
        %1506 = vset.pattern.permute.xlu0 0
        %1507 = vperm.xlu0 %1506, %v1493
        %v1508 = vpop.permute.xlu0 %1507
        %1511 = vset.pattern.permute.xlu0 0
        %1512 = vperm.xlu0 %1511, %v1494
        %v1513 = vpop.permute.xlu0 %1512
        %1516 = vset.pattern.permute.xlu0 0
        %1517 = vperm.xlu0 %1516, %v1495
        %v1518 = vpop.permute.xlu0 %1517
        %1521 = vset.pattern.permute.xlu0 0
        %1522 = vperm.xlu0 %1521, %v1496
        %v1523 = vpop.permute.xlu0 %1522
        %1526 = vset.pattern.permute.xlu0 0
        %1527 = vperm.xlu0 %1526, %v1497
        %v1528 = vpop.permute.xlu0 %1527
        %1531 = vset.pattern.permute.xlu0 0
        %1532 = vperm.xlu0 %1531, %v1498
        %v1533 = vpop.permute.xlu0 %1532
        %1536 = vset.pattern.permute.xlu0 0
        %1537 = vperm.xlu0 %1536, %v1499
        %v1538 = vpop.permute.xlu0 %1537
        %v1541 = vsel %vm613, %v1484, 0
        %v1544 = vsel %vm613, %v1485, 0
        %v1547 = vsel %vm613, %v1486, 0
        %v1550 = vsel %vm613, %v1487, 0
        %v1553 = vsel %vm613, %v1488, 0
        %v1556 = vsel %vm613, %v1489, 0
        %v1559 = vsel %vm613, %v1490, 0
        %v1562 = vsel %vm613, %v1491, 0
        %1564 = vmatprep.subr.mxu0 0.0
        %v1565 = vand.u32 %v1476, 4294901760
        %1566 = vmatpush1.msra.mxu0 %v1565
        %1567 = vmatprep.subr.mxu0 0.0
        %v1568 = vand.u32 %v1477, 4294901760
        %1569 = vmatpush1.msra.mxu0 %v1568
        %1570 = vmatprep.subr.mxu0 0.0
        %v1571 = vand.u32 %v1478, 4294901760
        %1572 = vmatpush1.msra.mxu0 %v1571
        %1573 = vmatprep.subr.mxu0 0.0
        %v1574 = vand.u32 %v1479, 4294901760
        %1575 = vmatpush1.msra.mxu0 %v1574
        %1576 = vmatprep.subr.mxu0 0.0
        %v1577 = vand.u32 %v1480, 4294901760
        %1578 = vmatpush1.msra.mxu0 %v1577
        %1579 = vmatprep.subr.mxu0 0.0
        %v1580 = vand.u32 %v1481, 4294901760
        %1581 = vmatpush1.msra.mxu0 %v1580
        %1582 = vmatprep.subr.mxu0 0.0
        %v1583 = vand.u32 %v1482, 4294901760
        %1584 = vmatpush1.msra.mxu0 %v1583
        %1585 = vmatprep.subr.mxu0 0.0
        %v1586 = vand.u32 %v1483, 4294901760
        %1587 = vmatpush1.msra.mxu0 %v1586
        %1588 = vmatprep.subr.mxu0 0.0
        %1589 = vmatpush1.msra.mxu0 0.0
        %1590 = vmatprep.subr.mxu0 0.0
        %1591 = vmatpush1.msra.mxu0 0.0
        %1592 = vmatprep.subr.mxu0 0.0
        %1593 = vmatpush1.msra.mxu0 0.0
        %1594 = vmatprep.subr.mxu0 0.0
        %1595 = vmatpush1.msra.mxu0 0.0
        %1596 = vmatprep.subr.mxu0 0.0
        %1597 = vmatpush1.msra.mxu0 0.0
        %1598 = vmatprep.subr.mxu0 0.0
        %1599 = vmatpush1.msra.mxu0 0.0
        %1600 = vmatprep.subr.mxu0 0.0
        %1601 = vmatpush1.msra.mxu0 0.0
        %1602 = vmatprep.subr.mxu0 0.0
        %1603 = vmatpush1.msra.mxu0 0.0
        %1604 = vmatprep.subr.mxu0 0.0
        %1605 = vmatpush1.msra.mxu0 0.0
        %1606 = vmatprep.subr.mxu0 0.0
        %1607 = vmatpush1.msra.mxu0 0.0
        %1608 = vmatprep.subr.mxu0 0.0
        %1609 = vmatpush1.msra.mxu0 0.0
        %1610 = vmatprep.subr.mxu0 0.0
        %1611 = vmatpush1.msra.mxu0 0.0
        %1612 = vmatprep.subr.mxu0 0.0
        %1613 = vmatpush1.msra.mxu0 0.0
        %1614 = vmatprep.subr.mxu0 0.0
        %1615 = vmatpush1.msra.mxu0 0.0
        %1616 = vmatprep.subr.mxu0 0.0
        %1617 = vmatpush1.msra.mxu0 0.0
        %1618 = vmatprep.subr.mxu0 0.0
        %1619 = vmatpush1.msra.mxu0 0.0
        %1620 = vmatprep.subr.mxu0 0.0
        %1621 = vmatpush1.msra.mxu0 0.0
        %1622 = vmatprep.subr.mxu0 0.0
        %1623 = vmatpush1.msra.mxu0 0.0
        %1624 = vmatprep.subr.mxu0 0.0
        %1625 = vmatpush1.msra.mxu0 0.0
        %1626 = vmatprep.subr.mxu0 0.0
        %1627 = vmatpush1.msra.mxu0 0.0
        %1628 = vmatprep.subr.mxu0 0.0
        %1629 = vmatpush1.msra.mxu0 0.0
        %1630 = vmatprep.subr.mxu0 0.0
        %1631 = vmatpush1.msra.mxu0 0.0
        %1632 = vmatprep.subr.mxu0 0.0
        %1633 = vmatpush1.msra.mxu0 0.0
        %1634 = vmatprep.subr.mxu0 0.0
        %1635 = vmatpush1.msra.mxu0 0.0
        %1636 = vmatprep.mubr.f32.mxu0 0.0
        %v1637 = vand.u32 %v1541, 4294901760
        %v1638 = vsub.f32 %v1541, %v1637
        %v1639 = vand.u32 %v1638, 4294901760
        %v1640 = vsub.f32 %v1638, %v1639
        %v1641 = vand.u32 %v1640, 4294901760
        %1642 = vmatmul.mubr.f32.gmra.mrb[0].mxu0 %v1641
        %v1643 = vpop.f32.mrb[0].mxu0
        %v1644 = vadd.f32 %v1503, %v1643
        %v1645 = vpop.f32.mrb[0].mxu0
        %1646 = vmatprep.mubr.f32.mxu0 0.0
        %v1647 = vand.u32 %v1544, 4294901760
        %v1648 = vsub.f32 %v1544, %v1647
        %v1649 = vand.u32 %v1648, 4294901760
        %v1650 = vsub.f32 %v1648, %v1649
        %v1651 = vand.u32 %v1650, 4294901760
        %1652 = vmatmul.mubr.f32.gmra.mrb[0].mxu0 %v1651
        %v1653 = vpop.f32.mrb[0].mxu0
        %v1654 = vadd.f32 %v1508, %v1653
        %v1655 = vpop.f32.mrb[0].mxu0
        %1656 = vmatprep.mubr.f32.mxu0 0.0
        %v1657 = vand.u32 %v1547, 4294901760
        %v1658 = vsub.f32 %v1547, %v1657
        %v1659 = vand.u32 %v1658, 4294901760
        %v1660 = vsub.f32 %v1658, %v1659
        %v1661 = vand.u32 %v1660, 4294901760
        %1662 = vmatmul.mubr.f32.gmra.mrb[0].mxu0 %v1661
        %v1663 = vpop.f32.mrb[0].mxu0
        %v1664 = vadd.f32 %v1513, %v1663
        %v1665 = vpop.f32.mrb[0].mxu0
        %1666 = vmatprep.mubr.f32.mxu0 0.0
        %v1667 = vand.u32 %v1550, 4294901760
        %v1668 = vsub.f32 %v1550, %v1667
        %v1669 = vand.u32 %v1668, 4294901760
        %v1670 = vsub.f32 %v1668, %v1669
        %v1671 = vand.u32 %v1670, 4294901760
        %1672 = vmatmul.mubr.f32.gmra.mrb[0].mxu0 %v1671
        %v1673 = vpop.f32.mrb[0].mxu0
        %v1674 = vadd.f32 %v1518, %v1673
        %v1675 = vpop.f32.mrb[0].mxu0
        %1676 = vmatprep.mubr.f32.mxu0 0.0
        %v1677 = vand.u32 %v1553, 4294901760
        %v1678 = vsub.f32 %v1553, %v1677
        %v1679 = vand.u32 %v1678, 4294901760
        %v1680 = vsub.f32 %v1678, %v1679
        %v1681 = vand.u32 %v1680, 4294901760
        %1682 = vmatmul.mubr.f32.gmra.mrb[0].mxu0 %v1681
        %v1683 = vpop.f32.mrb[0].mxu0
        %v1684 = vadd.f32 %v1523, %v1683
        %v1685 = vpop.f32.mrb[0].mxu0
        %1686 = vmatprep.mubr.f32.mxu0 0.0
        %v1687 = vand.u32 %v1556, 4294901760
        %v1688 = vsub.f32 %v1556, %v1687
        %v1689 = vand.u32 %v1688, 4294901760
        %v1690 = vsub.f32 %v1688, %v1689
        %v1691 = vand.u32 %v1690, 4294901760
        %1692 = vmatmul.mubr.f32.gmra.mrb[0].mxu0 %v1691
        %v1693 = vpop.f32.mrb[0].mxu0
        %v1694 = vadd.f32 %v1528, %v1693
        %v1695 = vpop.f32.mrb[0].mxu0
        %1696 = vmatprep.mubr.f32.mxu0 0.0
        %v1697 = vand.u32 %v1559, 4294901760
        %v1698 = vsub.f32 %v1559, %v1697
        %v1699 = vand.u32 %v1698, 4294901760
        %v1700 = vsub.f32 %v1698, %v1699
        %v1701 = vand.u32 %v1700, 4294901760
        %1702 = vmatmul.mubr.f32.gmra.mrb[0].mxu0 %v1701
        %v1703 = vpop.f32.mrb[0].mxu0
        %v1704 = vadd.f32 %v1533, %v1703
        %v1705 = vpop.f32.mrb[0].mxu0
        %1706 = vmatprep.mubr.f32.mxu0 0.0
        %v1707 = vand.u32 %v1562, 4294901760
        %v1708 = vsub.f32 %v1562, %v1707
        %v1709 = vand.u32 %v1708, 4294901760
        %v1710 = vsub.f32 %v1708, %v1709
        %v1711 = vand.u32 %v1710, 4294901760
        %1712 = vmatmul.mubr.f32.gmra.mrb[0].mxu0 %v1711
        %v1713 = vpop.f32.mrb[0].mxu0
        %v1714 = vadd.f32 %v1538, %v1713
        %v1715 = vpop.f32.mrb[0].mxu0
        %1716 = vdwg.mxu0
        %1717 = vmatprep.subr.mxu0 0.0
        %v1718 = vand.u32 %v1476, 4294901760
        %v1719 = vsub.f32 %v1476, %v1718
        %v1720 = vand.u32 %v1719, 4294901760
        %v1721 = vsub.f32 %v1719, %v1720
        %v1722 = vand.u32 %v1721, 4294901760
        %1723 = vmatpush1.msra.mxu0 %v1722
        %1724 = vmatprep.subr.mxu0 0.0
        %v1725 = vand.u32 %v1477, 4294901760
        %v1726 = vsub.f32 %v1477, %v1725
        %v1727 = vand.u32 %v1726, 4294901760
        %v1728 = vsub.f32 %v1726, %v1727
        %v1729 = vand.u32 %v1728, 4294901760
        %1730 = vmatpush1.msra.mxu0 %v1729
        %1731 = vmatprep.subr.mxu0 0.0
        %v1732 = vand.u32 %v1478, 4294901760
        %v1733 = vsub.f32 %v1478, %v1732
        %v1734 = vand.u32 %v1733, 4294901760
        %v1735 = vsub.f32 %v1733, %v1734
        %v1736 = vand.u32 %v1735, 4294901760
        %1737 = vmatpush1.msra.mxu0 %v1736
        %1738 = vmatprep.subr.mxu0 0.0
        %v1739 = vand.u32 %v1479, 4294901760
        %v1740 = vsub.f32 %v1479, %v1739
        %v1741 = vand.u32 %v1740, 4294901760
        %v1742 = vsub.f32 %v1740, %v1741
        %v1743 = vand.u32 %v1742, 4294901760
        %1744 = vmatpush1.msra.mxu0 %v1743
        %1745 = vmatprep.subr.mxu0 0.0
        %v1746 = vand.u32 %v1480, 4294901760
        %v1747 = vsub.f32 %v1480, %v1746
        %v1748 = vand.u32 %v1747, 4294901760
        %v1749 = vsub.f32 %v1747, %v1748
        %v1750 = vand.u32 %v1749, 4294901760
        %1751 = vmatpush1.msra.mxu0 %v1750
        %1752 = vmatprep.subr.mxu0 0.0
        %v1753 = vand.u32 %v1481, 4294901760
        %v1754 = vsub.f32 %v1481, %v1753
        %v1755 = vand.u32 %v1754, 4294901760
        %v1756 = vsub.f32 %v1754, %v1755
        %v1757 = vand.u32 %v1756, 4294901760
        %1758 = vmatpush1.msra.mxu0 %v1757
        %1759 = vmatprep.subr.mxu0 0.0
        %v1760 = vand.u32 %v1482, 4294901760
        %v1761 = vsub.f32 %v1482, %v1760
        %v1762 = vand.u32 %v1761, 4294901760
        %v1763 = vsub.f32 %v1761, %v1762
        %v1764 = vand.u32 %v1763, 4294901760
        %1765 = vmatpush1.msra.mxu0 %v1764
        %1766 = vmatprep.subr.mxu0 0.0
        %v1767 = vand.u32 %v1483, 4294901760
        %v1768 = vsub.f32 %v1483, %v1767
        %v1769 = vand.u32 %v1768, 4294901760
        %v1770 = vsub.f32 %v1768, %v1769
        %v1771 = vand.u32 %v1770, 4294901760
        %1772 = vmatpush1.msra.mxu0 %v1771
        %1773 = vmatprep.subr.mxu0 0.0
        %1774 = vmatpush1.msra.mxu0 0.0
        %1775 = vmatprep.subr.mxu0 0.0
        %1776 = vmatpush1.msra.mxu0 0.0
        %1777 = vmatprep.subr.mxu0 0.0
        %1778 = vmatpush1.msra.mxu0 0.0
        %1779 = vmatprep.subr.mxu0 0.0
        %1780 = vmatpush1.msra.mxu0 0.0
        %1781 = vmatprep.subr.mxu0 0.0
        %1782 = vmatpush1.msra.mxu0 0.0
        %1783 = vmatprep.subr.mxu0 0.0
        %1784 = vmatpush1.msra.mxu0 0.0
        %1785 = vmatprep.subr.mxu0 0.0
        %1786 = vmatpush1.msra.mxu0 0.0
        %1787 = vmatprep.subr.mxu0 0.0
        %1788 = vmatpush1.msra.mxu0 0.0
        %1789 = vmatprep.subr.mxu0 0.0
        %1790 = vmatpush1.msra.mxu0 0.0
        %1791 = vmatprep.subr.mxu0 0.0
        %1792 = vmatpush1.msra.mxu0 0.0
        %1793 = vmatprep.subr.mxu0 0.0
        %1794 = vmatpush1.msra.mxu0 0.0
        %1795 = vmatprep.subr.mxu0 0.0
        %1796 = vmatpush1.msra.mxu0 0.0
        %1797 = vmatprep.subr.mxu0 0.0
        %1798 = vmatpush1.msra.mxu0 0.0
        %1799 = vmatprep.subr.mxu0 0.0
        %1800 = vmatpush1.msra.mxu0 0.0
        %1801 = vmatprep.subr.mxu0 0.0
        %1802 = vmatpush1.msra.mxu0 0.0
        %1803 = vmatprep.subr.mxu0 0.0
        %1804 = vmatpush1.msra.mxu0 0.0
        %1805 = vmatprep.subr.mxu0 0.0
        %1806 = vmatpush1.msra.mxu0 0.0
        %1807 = vmatprep.subr.mxu0 0.0
        %1808 = vmatpush1.msra.mxu0 0.0
        %1809 = vmatprep.subr.mxu0 0.0
        %1810 = vmatpush1.msra.mxu0 0.0
        %1811 = vmatprep.subr.mxu0 0.0
        %1812 = vmatpush1.msra.mxu0 0.0
        %1813 = vmatprep.subr.mxu0 0.0
        %1814 = vmatpush1.msra.mxu0 0.0
        %1815 = vmatprep.subr.mxu0 0.0
        %1816 = vmatpush1.msra.mxu0 0.0
        %1817 = vmatprep.subr.mxu0 0.0
        %1818 = vmatpush1.msra.mxu0 0.0
        %1819 = vmatprep.subr.mxu0 0.0
        %1820 = vmatpush1.msra.mxu0 0.0
        %1821 = vmatprep.mubr.f32.mxu0 0.0
        %v1822 = vand.u32 %v1541, 4294901760
        %1823 = vmatmul.mubr.f32.gmra.mrb[0].mxu0 %v1822
        %v1824 = vpop.f32.mrb[0].mxu0
        %v1825 = vadd.f32 %v1644, %v1824
        %v1826 = vpop.f32.mrb[0].mxu0
        %1827 = vmatprep.mubr.f32.mxu0 0.0
        %v1828 = vand.u32 %v1544, 4294901760
        %1829 = vmatmul.mubr.f32.gmra.mrb[0].mxu0 %v1828
        %v1830 = vpop.f32.mrb[0].mxu0
        %v1831 = vadd.f32 %v1654, %v1830
        %v1832 = vpop.f32.mrb[0].mxu0
        %1833 = vmatprep.mubr.f32.mxu0 0.0
        %v1834 = vand.u32 %v1547, 4294901760
        %1835 = vmatmul.mubr.f32.gmra.mrb[0].mxu0 %v1834
        %v1836 = vpop.f32.mrb[0].mxu0
        %v1837 = vadd.f32 %v1664, %v1836
        %v1838 = vpop.f32.mrb[0].mxu0
        %1839 = vmatprep.mubr.f32.mxu0 0.0
        %v1840 = vand.u32 %v1550, 4294901760
        %1841 = vmatmul.mubr.f32.gmra.mrb[0].mxu0 %v1840
        %v1842 = vpop.f32.mrb[0].mxu0
        %v1843 = vadd.f32 %v1674, %v1842
        %v1844 = vpop.f32.mrb[0].mxu0
        %1845 = vmatprep.mubr.f32.mxu0 0.0
        %v1846 = vand.u32 %v1553, 4294901760
        %1847 = vmatmul.mubr.f32.gmra.mrb[0].mxu0 %v1846
        %v1848 = vpop.f32.mrb[0].mxu0
        %v1849 = vadd.f32 %v1684, %v1848
        %v1850 = vpop.f32.mrb[0].mxu0
        %1851 = vmatprep.mubr.f32.mxu0 0.0
        %v1852 = vand.u32 %v1556, 4294901760
        %1853 = vmatmul.mubr.f32.gmra.mrb[0].mxu0 %v1852
        %v1854 = vpop.f32.mrb[0].mxu0
        %v1855 = vadd.f32 %v1694, %v1854
        %v1856 = vpop.f32.mrb[0].mxu0
        %1857 = vmatprep.mubr.f32.mxu0 0.0
        %v1858 = vand.u32 %v1559, 4294901760
        %1859 = vmatmul.mubr.f32.gmra.mrb[0].mxu0 %v1858
        %v1860 = vpop.f32.mrb[0].mxu0
        %v1861 = vadd.f32 %v1704, %v1860
        %v1862 = vpop.f32.mrb[0].mxu0
        %1863 = vmatprep.mubr.f32.mxu0 0.0
        %v1864 = vand.u32 %v1562, 4294901760
        %1865 = vmatmul.mubr.f32.gmra.mrb[0].mxu0 %v1864
        %v1866 = vpop.f32.mrb[0].mxu0
        %v1867 = vadd.f32 %v1714, %v1866
        %v1868 = vpop.f32.mrb[0].mxu0
        %1869 = vdwg.mxu0
        %1870 = vmatprep.subr.mxu0 0.0
        %v1871 = vand.u32 %v1476, 4294901760
        %v1872 = vsub.f32 %v1476, %v1871
        %1873 = vmatpush1.msra.mxu0 %v1872
        %1874 = vmatprep.subr.mxu0 0.0
        %v1875 = vand.u32 %v1477, 4294901760
        %v1876 = vsub.f32 %v1477, %v1875
        %1877 = vmatpush1.msra.mxu0 %v1876
        %1878 = vmatprep.subr.mxu0 0.0
        %v1879 = vand.u32 %v1478, 4294901760
        %v1880 = vsub.f32 %v1478, %v1879
        %1881 = vmatpush1.msra.mxu0 %v1880
        %1882 = vmatprep.subr.mxu0 0.0
        %v1883 = vand.u32 %v1479, 4294901760
        %v1884 = vsub.f32 %v1479, %v1883
        %1885 = vmatpush1.msra.mxu0 %v1884
        %1886 = vmatprep.subr.mxu0 0.0
        %v1887 = vand.u32 %v1480, 4294901760
        %v1888 = vsub.f32 %v1480, %v1887
        %1889 = vmatpush1.msra.mxu0 %v1888
        %1890 = vmatprep.subr.mxu0 0.0
        %v1891 = vand.u32 %v1481, 4294901760
        %v1892 = vsub.f32 %v1481, %v1891
        %1893 = vmatpush1.msra.mxu0 %v1892
        %1894 = vmatprep.subr.mxu0 0.0
        %v1895 = vand.u32 %v1482, 4294901760
        %v1896 = vsub.f32 %v1482, %v1895
        %1897 = vmatpush1.msra.mxu0 %v1896
        %1898 = vmatprep.subr.mxu0 0.0
        %v1899 = vand.u32 %v1483, 4294901760
        %v1900 = vsub.f32 %v1483, %v1899
        %1901 = vmatpush1.msra.mxu0 %v1900
        %1902 = vmatprep.subr.mxu0 0.0
        %1903 = vmatpush1.msra.mxu0 0.0
        %1904 = vmatprep.subr.mxu0 0.0
        %1905 = vmatpush1.msra.mxu0 0.0
        %1906 = vmatprep.subr.mxu0 0.0
        %1907 = vmatpush1.msra.mxu0 0.0
        %1908 = vmatprep.subr.mxu0 0.0
        %1909 = vmatpush1.msra.mxu0 0.0
        %1910 = vmatprep.subr.mxu0 0.0
        %1911 = vmatpush1.msra.mxu0 0.0
        %1912 = vmatprep.subr.mxu0 0.0
        %1913 = vmatpush1.msra.mxu0 0.0
        %1914 = vmatprep.subr.mxu0 0.0
        %1915 = vmatpush1.msra.mxu0 0.0
        %1916 = vmatprep.subr.mxu0 0.0
        %1917 = vmatpush1.msra.mxu0 0.0
        %1918 = vmatprep.subr.mxu0 0.0
        %1919 = vmatpush1.msra.mxu0 0.0
        %1920 = vmatprep.subr.mxu0 0.0
        %1921 = vmatpush1.msra.mxu0 0.0
        %1922 = vmatprep.subr.mxu0 0.0
        %1923 = vmatpush1.msra.mxu0 0.0
        %1924 = vmatprep.subr.mxu0 0.0
        %1925 = vmatpush1.msra.mxu0 0.0
        %1926 = vmatprep.subr.mxu0 0.0
        %1927 = vmatpush1.msra.mxu0 0.0
        %1928 = vmatprep.subr.mxu0 0.0
        %1929 = vmatpush1.msra.mxu0 0.0
        %1930 = vmatprep.subr.mxu0 0.0
        %1931 = vmatpush1.msra.mxu0 0.0
        %1932 = vmatprep.subr.mxu0 0.0
        %1933 = vmatpush1.msra.mxu0 0.0
        %1934 = vmatprep.subr.mxu0 0.0
        %1935 = vmatpush1.msra.mxu0 0.0
        %1936 = vmatprep.subr.mxu0 0.0
        %1937 = vmatpush1.msra.mxu0 0.0
        %1938 = vmatprep.subr.mxu0 0.0
        %1939 = vmatpush1.msra.mxu0 0.0
        %1940 = vmatprep.subr.mxu0 0.0
        %1941 = vmatpush1.msra.mxu0 0.0
        %1942 = vmatprep.subr.mxu0 0.0
        %1943 = vmatpush1.msra.mxu0 0.0
        %1944 = vmatprep.subr.mxu0 0.0
        %1945 = vmatpush1.msra.mxu0 0.0
        %1946 = vmatprep.subr.mxu0 0.0
        %1947 = vmatpush1.msra.mxu0 0.0
        %1948 = vmatprep.subr.mxu0 0.0
        %1949 = vmatpush1.msra.mxu0 0.0
        %1950 = vmatprep.mubr.f32.mxu0 0.0
        %v1951 = vand.u32 %v1541, 4294901760
        %v1952 = vsub.f32 %v1541, %v1951
        %1953 = vmatmul.mubr.f32.gmra.mrb[0].mxu0 %v1952
        %v1954 = vpop.f32.mrb[0].mxu0
        %v1955 = vadd.f32 %v1825, %v1954
        %v1956 = vpop.f32.mrb[0].mxu0
        %1957 = vmatprep.mubr.f32.mxu0 0.0
        %v1958 = vand.u32 %v1544, 4294901760
        %v1959 = vsub.f32 %v1544, %v1958
        %1960 = vmatmul.mubr.f32.gmra.mrb[0].mxu0 %v1959
        %v1961 = vpop.f32.mrb[0].mxu0
        %v1962 = vadd.f32 %v1831, %v1961
        %v1963 = vpop.f32.mrb[0].mxu0
        %1964 = vmatprep.mubr.f32.mxu0 0.0
        %v1965 = vand.u32 %v1547, 4294901760
        %v1966 = vsub.f32 %v1547, %v1965
        %1967 = vmatmul.mubr.f32.gmra.mrb[0].mxu0 %v1966
        %v1968 = vpop.f32.mrb[0].mxu0
        %v1969 = vadd.f32 %v1837, %v1968
        %v1970 = vpop.f32.mrb[0].mxu0
        %1971 = vmatprep.mubr.f32.mxu0 0.0
        %v1972 = vand.u32 %v1550, 4294901760
        %v1973 = vsub.f32 %v1550, %v1972
        %1974 = vmatmul.mubr.f32.gmra.mrb[0].mxu0 %v1973
        %v1975 = vpop.f32.mrb[0].mxu0
        %v1976 = vadd.f32 %v1843, %v1975
        %v1977 = vpop.f32.mrb[0].mxu0
        %1978 = vmatprep.mubr.f32.mxu0 0.0
        %v1979 = vand.u32 %v1553, 4294901760
        %v1980 = vsub.f32 %v1553, %v1979
        %1981 = vmatmul.mubr.f32.gmra.mrb[0].mxu0 %v1980
        %v1982 = vpop.f32.mrb[0].mxu0
        %v1983 = vadd.f32 %v1849, %v1982
        %v1984 = vpop.f32.mrb[0].mxu0
        %1985 = vmatprep.mubr.f32.mxu0 0.0
        %v1986 = vand.u32 %v1556, 4294901760
        %v1987 = vsub.f32 %v1556, %v1986
        %1988 = vmatmul.mubr.f32.gmra.mrb[0].mxu0 %v1987
        %v1989 = vpop.f32.mrb[0].mxu0
        %v1990 = vadd.f32 %v1855, %v1989
        %v1991 = vpop.f32.mrb[0].mxu0
        %1992 = vmatprep.mubr.f32.mxu0 0.0
        %v1993 = vand.u32 %v1559, 4294901760
        %v1994 = vsub.f32 %v1559, %v1993
        %1995 = vmatmul.mubr.f32.gmra.mrb[0].mxu0 %v1994
        %v1996 = vpop.f32.mrb[0].mxu0
        %v1997 = vadd.f32 %v1861, %v1996
        %v1998 = vpop.f32.mrb[0].mxu0
        %1999 = vmatprep.mubr.f32.mxu0 0.0
        %v2000 = vand.u32 %v1562, 4294901760
        %v2001 = vsub.f32 %v1562, %v2000
        %2002 = vmatmul.mubr.f32.gmra.mrb[0].mxu0 %v2001
        %v2003 = vpop.f32.mrb[0].mxu0
        %v2004 = vadd.f32 %v1867, %v2003
        %v2005 = vpop.f32.mrb[0].mxu0
        %2006 = vdwg.mxu0
        %2007 = vmatprep.subr.mxu0 0.0
        %v2008 = vand.u32 %v1476, 4294901760
        %2009 = vmatpush1.msra.mxu0 %v2008
        %2010 = vmatprep.subr.mxu0 0.0
        %v2011 = vand.u32 %v1477, 4294901760
        %2012 = vmatpush1.msra.mxu0 %v2011
        %2013 = vmatprep.subr.mxu0 0.0
        %v2014 = vand.u32 %v1478, 4294901760
        %2015 = vmatpush1.msra.mxu0 %v2014
        %2016 = vmatprep.subr.mxu0 0.0
        %v2017 = vand.u32 %v1479, 4294901760
        %2018 = vmatpush1.msra.mxu0 %v2017
        %2019 = vmatprep.subr.mxu0 0.0
        %v2020 = vand.u32 %v1480, 4294901760
        %2021 = vmatpush1.msra.mxu0 %v2020
        %2022 = vmatprep.subr.mxu0 0.0
        %v2023 = vand.u32 %v1481, 4294901760
        %2024 = vmatpush1.msra.mxu0 %v2023
        %2025 = vmatprep.subr.mxu0 0.0
        %v2026 = vand.u32 %v1482, 4294901760
        %2027 = vmatpush1.msra.mxu0 %v2026
        %2028 = vmatprep.subr.mxu0 0.0
        %v2029 = vand.u32 %v1483, 4294901760
        %2030 = vmatpush1.msra.mxu0 %v2029
        %2031 = vmatprep.subr.mxu0 0.0
        %2032 = vmatpush1.msra.mxu0 0.0
        %2033 = vmatprep.subr.mxu0 0.0
        %2034 = vmatpush1.msra.mxu0 0.0
        %2035 = vmatprep.subr.mxu0 0.0
        %2036 = vmatpush1.msra.mxu0 0.0
        %2037 = vmatprep.subr.mxu0 0.0
        %2038 = vmatpush1.msra.mxu0 0.0
        %2039 = vmatprep.subr.mxu0 0.0
        %2040 = vmatpush1.msra.mxu0 0.0
        %2041 = vmatprep.subr.mxu0 0.0
        %2042 = vmatpush1.msra.mxu0 0.0
        %2043 = vmatprep.subr.mxu0 0.0
        %2044 = vmatpush1.msra.mxu0 0.0
        %2045 = vmatprep.subr.mxu0 0.0
        %2046 = vmatpush1.msra.mxu0 0.0
        %2047 = vmatprep.subr.mxu0 0.0
        %2048 = vmatpush1.msra.mxu0 0.0
        %2049 = vmatprep.subr.mxu0 0.0
        %2050 = vmatpush1.msra.mxu0 0.0
        %2051 = vmatprep.subr.mxu0 0.0
        %2052 = vmatpush1.msra.mxu0 0.0
        %2053 = vmatprep.subr.mxu0 0.0
        %2054 = vmatpush1.msra.mxu0 0.0
        %2055 = vmatprep.subr.mxu0 0.0
        %2056 = vmatpush1.msra.mxu0 0.0
        %2057 = vmatprep.subr.mxu0 0.0
        %2058 = vmatpush1.msra.mxu0 0.0
        %2059 = vmatprep.subr.mxu0 0.0
        %2060 = vmatpush1.msra.mxu0 0.0
        %2061 = vmatprep.subr.mxu0 0.0
        %2062 = vmatpush1.msra.mxu0 0.0
        %2063 = vmatprep.subr.mxu0 0.0
        %2064 = vmatpush1.msra.mxu0 0.0
        %2065 = vmatprep.subr.mxu0 0.0
        %2066 = vmatpush1.msra.mxu0 0.0
        %2067 = vmatprep.subr.mxu0 0.0
        %2068 = vmatpush1.msra.mxu0 0.0
        %2069 = vmatprep.subr.mxu0 0.0
        %2070 = vmatpush1.msra.mxu0 0.0
        %2071 = vmatprep.subr.mxu0 0.0
        %2072 = vmatpush1.msra.mxu0 0.0
        %2073 = vmatprep.subr.mxu0 0.0
        %2074 = vmatpush1.msra.mxu0 0.0
        %2075 = vmatprep.subr.mxu0 0.0
        %2076 = vmatpush1.msra.mxu0 0.0
        %2077 = vmatprep.subr.mxu0 0.0
        %2078 = vmatpush1.msra.mxu0 0.0
        %2079 = vmatprep.mubr.f32.mxu0 0.0
        %v2080 = vand.u32 %v1541, 4294901760
        %v2081 = vsub.f32 %v1541, %v2080
        %v2082 = vand.u32 %v2081, 4294901760
        %2083 = vmatmul.mubr.f32.gmra.mrb[0].mxu0 %v2082
        %v2084 = vpop.f32.mrb[0].mxu0
        %v2085 = vadd.f32 %v1955, %v2084
        %v2086 = vpop.f32.mrb[0].mxu0
        %2087 = vmatprep.mubr.f32.mxu0 0.0
        %v2088 = vand.u32 %v1544, 4294901760
        %v2089 = vsub.f32 %v1544, %v2088
        %v2090 = vand.u32 %v2089, 4294901760
        %2091 = vmatmul.mubr.f32.gmra.mrb[0].mxu0 %v2090
        %v2092 = vpop.f32.mrb[0].mxu0
        %v2093 = vadd.f32 %v1962, %v2092
        %v2094 = vpop.f32.mrb[0].mxu0
        %2095 = vmatprep.mubr.f32.mxu0 0.0
        %v2096 = vand.u32 %v1547, 4294901760
        %v2097 = vsub.f32 %v1547, %v2096
        %v2098 = vand.u32 %v2097, 4294901760
        %2099 = vmatmul.mubr.f32.gmra.mrb[0].mxu0 %v2098
        %v2100 = vpop.f32.mrb[0].mxu0
        %v2101 = vadd.f32 %v1969, %v2100
        %v2102 = vpop.f32.mrb[0].mxu0
        %2103 = vmatprep.mubr.f32.mxu0 0.0
        %v2104 = vand.u32 %v1550, 4294901760
        %v2105 = vsub.f32 %v1550, %v2104
        %v2106 = vand.u32 %v2105, 4294901760
        %2107 = vmatmul.mubr.f32.gmra.mrb[0].mxu0 %v2106
        %v2108 = vpop.f32.mrb[0].mxu0
        %v2109 = vadd.f32 %v1976, %v2108
        %v2110 = vpop.f32.mrb[0].mxu0
        %2111 = vmatprep.mubr.f32.mxu0 0.0
        %v2112 = vand.u32 %v1553, 4294901760
        %v2113 = vsub.f32 %v1553, %v2112
        %v2114 = vand.u32 %v2113, 4294901760
        %2115 = vmatmul.mubr.f32.gmra.mrb[0].mxu0 %v2114
        %v2116 = vpop.f32.mrb[0].mxu0
        %v2117 = vadd.f32 %v1983, %v2116
        %v2118 = vpop.f32.mrb[0].mxu0
        %2119 = vmatprep.mubr.f32.mxu0 0.0
        %v2120 = vand.u32 %v1556, 4294901760
        %v2121 = vsub.f32 %v1556, %v2120
        %v2122 = vand.u32 %v2121, 4294901760
        %2123 = vmatmul.mubr.f32.gmra.mrb[0].mxu0 %v2122
        %v2124 = vpop.f32.mrb[0].mxu0
        %v2125 = vadd.f32 %v1990, %v2124
        %v2126 = vpop.f32.mrb[0].mxu0
        %2127 = vmatprep.mubr.f32.mxu0 0.0
        %v2128 = vand.u32 %v1559, 4294901760
        %v2129 = vsub.f32 %v1559, %v2128
        %v2130 = vand.u32 %v2129, 4294901760
        %2131 = vmatmul.mubr.f32.gmra.mrb[0].mxu0 %v2130
        %v2132 = vpop.f32.mrb[0].mxu0
        %v2133 = vadd.f32 %v1997, %v2132
        %v2134 = vpop.f32.mrb[0].mxu0
        %2135 = vmatprep.mubr.f32.mxu0 0.0
        %v2136 = vand.u32 %v1562, 4294901760
        %v2137 = vsub.f32 %v1562, %v2136
        %v2138 = vand.u32 %v2137, 4294901760
        %2139 = vmatmul.mubr.f32.gmra.mrb[0].mxu0 %v2138
        %v2140 = vpop.f32.mrb[0].mxu0
        %v2141 = vadd.f32 %v2004, %v2140
        %v2142 = vpop.f32.mrb[0].mxu0
        %2143 = vdwg.mxu0
        %2144 = vmatprep.subr.mxu0 0.0
        %v2145 = vand.u32 %v1476, 4294901760
        %v2146 = vsub.f32 %v1476, %v2145
        %v2147 = vand.u32 %v2146, 4294901760
        %2148 = vmatpush1.msra.mxu0 %v2147
        %2149 = vmatprep.subr.mxu0 0.0
        %v2150 = vand.u32 %v1477, 4294901760
        %v2151 = vsub.f32 %v1477, %v2150
        %v2152 = vand.u32 %v2151, 4294901760
        %2153 = vmatpush1.msra.mxu0 %v2152
        %2154 = vmatprep.subr.mxu0 0.0
        %v2155 = vand.u32 %v1478, 4294901760
        %v2156 = vsub.f32 %v1478, %v2155
        %v2157 = vand.u32 %v2156, 4294901760
        %2158 = vmatpush1.msra.mxu0 %v2157
        %2159 = vmatprep.subr.mxu0 0.0
        %v2160 = vand.u32 %v1479, 4294901760
        %v2161 = vsub.f32 %v1479, %v2160
        %v2162 = vand.u32 %v2161, 4294901760
        %2163 = vmatpush1.msra.mxu0 %v2162
        %2164 = vmatprep.subr.mxu0 0.0
        %v2165 = vand.u32 %v1480, 4294901760
        %v2166 = vsub.f32 %v1480, %v2165
        %v2167 = vand.u32 %v2166, 4294901760
        %2168 = vmatpush1.msra.mxu0 %v2167
        %2169 = vmatprep.subr.mxu0 0.0
        %v2170 = vand.u32 %v1481, 4294901760
        %v2171 = vsub.f32 %v1481, %v2170
        %v2172 = vand.u32 %v2171, 4294901760
        %2173 = vmatpush1.msra.mxu0 %v2172
        %2174 = vmatprep.subr.mxu0 0.0
        %v2175 = vand.u32 %v1482, 4294901760
        %v2176 = vsub.f32 %v1482, %v2175
        %v2177 = vand.u32 %v2176, 4294901760
        %2178 = vmatpush1.msra.mxu0 %v2177
        %2179 = vmatprep.subr.mxu0 0.0
        %v2180 = vand.u32 %v1483, 4294901760
        %v2181 = vsub.f32 %v1483, %v2180
        %v2182 = vand.u32 %v2181, 4294901760
        %2183 = vmatpush1.msra.mxu0 %v2182
        %2184 = vmatprep.subr.mxu0 0.0
        %2185 = vmatpush1.msra.mxu0 0.0
        %2186 = vmatprep.subr.mxu0 0.0
        %2187 = vmatpush1.msra.mxu0 0.0
        %2188 = vmatprep.subr.mxu0 0.0
        %2189 = vmatpush1.msra.mxu0 0.0
        %2190 = vmatprep.subr.mxu0 0.0
        %2191 = vmatpush1.msra.mxu0 0.0
        %2192 = vmatprep.subr.mxu0 0.0
        %2193 = vmatpush1.msra.mxu0 0.0
        %2194 = vmatprep.subr.mxu0 0.0
        %2195 = vmatpush1.msra.mxu0 0.0
        %2196 = vmatprep.subr.mxu0 0.0
        %2197 = vmatpush1.msra.mxu0 0.0
        %2198 = vmatprep.subr.mxu0 0.0
        %2199 = vmatpush1.msra.mxu0 0.0
        %2200 = vmatprep.subr.mxu0 0.0
        %2201 = vmatpush1.msra.mxu0 0.0
        %2202 = vmatprep.subr.mxu0 0.0
        %2203 = vmatpush1.msra.mxu0 0.0
        %2204 = vmatprep.subr.mxu0 0.0
        %2205 = vmatpush1.msra.mxu0 0.0
        %2206 = vmatprep.subr.mxu0 0.0
        %2207 = vmatpush1.msra.mxu0 0.0
        %2208 = vmatprep.subr.mxu0 0.0
        %2209 = vmatpush1.msra.mxu0 0.0
        %2210 = vmatprep.subr.mxu0 0.0
        %2211 = vmatpush1.msra.mxu0 0.0
        %2212 = vmatprep.subr.mxu0 0.0
        %2213 = vmatpush1.msra.mxu0 0.0
        %2214 = vmatprep.subr.mxu0 0.0
        %2215 = vmatpush1.msra.mxu0 0.0
        %2216 = vmatprep.subr.mxu0 0.0
        %2217 = vmatpush1.msra.mxu0 0.0
        %2218 = vmatprep.subr.mxu0 0.0
        %2219 = vmatpush1.msra.mxu0 0.0
        %2220 = vmatprep.subr.mxu0 0.0
        %2221 = vmatpush1.msra.mxu0 0.0
        %2222 = vmatprep.subr.mxu0 0.0
        %2223 = vmatpush1.msra.mxu0 0.0
        %2224 = vmatprep.subr.mxu0 0.0
        %2225 = vmatpush1.msra.mxu0 0.0
        %2226 = vmatprep.subr.mxu0 0.0
        %2227 = vmatpush1.msra.mxu0 0.0
        %2228 = vmatprep.subr.mxu0 0.0
        %2229 = vmatpush1.msra.mxu0 0.0
        %2230 = vmatprep.subr.mxu0 0.0
        %2231 = vmatpush1.msra.mxu0 0.0
        %2232 = vmatprep.mubr.f32.mxu0 0.0
        %v2233 = vand.u32 %v1541, 4294901760
        %2234 = vmatmul.mubr.f32.gmra.mrb[0].mxu0 %v2233
        %v2235 = vpop.f32.mrb[0].mxu0
        %v2236 = vadd.f32 %v2085, %v2235
        %v2237 = vpop.f32.mrb[0].mxu0
        %2238 = vmatprep.mubr.f32.mxu0 0.0
        %v2239 = vand.u32 %v1544, 4294901760
        %2240 = vmatmul.mubr.f32.gmra.mrb[0].mxu0 %v2239
        %v2241 = vpop.f32.mrb[0].mxu0
        %v2242 = vadd.f32 %v2093, %v2241
        %v2243 = vpop.f32.mrb[0].mxu0
        %2244 = vmatprep.mubr.f32.mxu0 0.0
        %v2245 = vand.u32 %v1547, 4294901760
        %2246 = vmatmul.mubr.f32.gmra.mrb[0].mxu0 %v2245
        %v2247 = vpop.f32.mrb[0].mxu0
        %v2248 = vadd.f32 %v2101, %v2247
        %v2249 = vpop.f32.mrb[0].mxu0
        %2250 = vmatprep.mubr.f32.mxu0 0.0
        %v2251 = vand.u32 %v1550, 4294901760
        %2252 = vmatmul.mubr.f32.gmra.mrb[0].mxu0 %v2251
        %v2253 = vpop.f32.mrb[0].mxu0
        %v2254 = vadd.f32 %v2109, %v2253
        %v2255 = vpop.f32.mrb[0].mxu0
        %2256 = vmatprep.mubr.f32.mxu0 0.0
        %v2257 = vand.u32 %v1553, 4294901760
        %2258 = vmatmul.mubr.f32.gmra.mrb[0].mxu0 %v2257
        %v2259 = vpop.f32.mrb[0].mxu0
        %v2260 = vadd.f32 %v2117, %v2259
        %v2261 = vpop.f32.mrb[0].mxu0
        %2262 = vmatprep.mubr.f32.mxu0 0.0
        %v2263 = vand.u32 %v1556, 4294901760
        %2264 = vmatmul.mubr.f32.gmra.mrb[0].mxu0 %v2263
        %v2265 = vpop.f32.mrb[0].mxu0
        %v2266 = vadd.f32 %v2125, %v2265
        %v2267 = vpop.f32.mrb[0].mxu0
        %2268 = vmatprep.mubr.f32.mxu0 0.0
        %v2269 = vand.u32 %v1559, 4294901760
        %2270 = vmatmul.mubr.f32.gmra.mrb[0].mxu0 %v2269
        %v2271 = vpop.f32.mrb[0].mxu0
        %v2272 = vadd.f32 %v2133, %v2271
        %v2273 = vpop.f32.mrb[0].mxu0
        %2274 = vmatprep.mubr.f32.mxu0 0.0
        %v2275 = vand.u32 %v1562, 4294901760
        %2276 = vmatmul.mubr.f32.gmra.mrb[0].mxu0 %v2275
        %v2277 = vpop.f32.mrb[0].mxu0
        %v2278 = vadd.f32 %v2141, %v2277
        %v2279 = vpop.f32.mrb[0].mxu0
        %2280 = vdwg.mxu0
        %2281 = vmatprep.subr.mxu0 0.0
        %v2282 = vand.u32 %v1476, 4294901760
        %2283 = vmatpush1.msra.mxu0 %v2282
        %2284 = vmatprep.subr.mxu0 0.0
        %v2285 = vand.u32 %v1477, 4294901760
        %2286 = vmatpush1.msra.mxu0 %v2285
        %2287 = vmatprep.subr.mxu0 0.0
        %v2288 = vand.u32 %v1478, 4294901760
        %2289 = vmatpush1.msra.mxu0 %v2288
        %2290 = vmatprep.subr.mxu0 0.0
        %v2291 = vand.u32 %v1479, 4294901760
        %2292 = vmatpush1.msra.mxu0 %v2291
        %2293 = vmatprep.subr.mxu0 0.0
        %v2294 = vand.u32 %v1480, 4294901760
        %2295 = vmatpush1.msra.mxu0 %v2294
        %2296 = vmatprep.subr.mxu0 0.0
        %v2297 = vand.u32 %v1481, 4294901760
        %2298 = vmatpush1.msra.mxu0 %v2297
        %2299 = vmatprep.subr.mxu0 0.0
        %v2300 = vand.u32 %v1482, 4294901760
        %2301 = vmatpush1.msra.mxu0 %v2300
        %2302 = vmatprep.subr.mxu0 0.0
        %v2303 = vand.u32 %v1483, 4294901760
        %2304 = vmatpush1.msra.mxu0 %v2303
        %2305 = vmatprep.subr.mxu0 0.0
        %2306 = vmatpush1.msra.mxu0 0.0
        %2307 = vmatprep.subr.mxu0 0.0
        %2308 = vmatpush1.msra.mxu0 0.0
        %2309 = vmatprep.subr.mxu0 0.0
        %2310 = vmatpush1.msra.mxu0 0.0
        %2311 = vmatprep.subr.mxu0 0.0
        %2312 = vmatpush1.msra.mxu0 0.0
        %2313 = vmatprep.subr.mxu0 0.0
        %2314 = vmatpush1.msra.mxu0 0.0
        %2315 = vmatprep.subr.mxu0 0.0
        %2316 = vmatpush1.msra.mxu0 0.0
        %2317 = vmatprep.subr.mxu0 0.0
        %2318 = vmatpush1.msra.mxu0 0.0
        %2319 = vmatprep.subr.mxu0 0.0
        %2320 = vmatpush1.msra.mxu0 0.0
        %2321 = vmatprep.subr.mxu0 0.0
        %2322 = vmatpush1.msra.mxu0 0.0
        %2323 = vmatprep.subr.mxu0 0.0
        %2324 = vmatpush1.msra.mxu0 0.0
        %2325 = vmatprep.subr.mxu0 0.0
        %2326 = vmatpush1.msra.mxu0 0.0
        %2327 = vmatprep.subr.mxu0 0.0
        %2328 = vmatpush1.msra.mxu0 0.0
        %2329 = vmatprep.subr.mxu0 0.0
        %2330 = vmatpush1.msra.mxu0 0.0
        %2331 = vmatprep.subr.mxu0 0.0
        %2332 = vmatpush1.msra.mxu0 0.0
        %2333 = vmatprep.subr.mxu0 0.0
        %2334 = vmatpush1.msra.mxu0 0.0
        %2335 = vmatprep.subr.mxu0 0.0
        %2336 = vmatpush1.msra.mxu0 0.0
        %2337 = vmatprep.subr.mxu0 0.0
        %2338 = vmatpush1.msra.mxu0 0.0
        %2339 = vmatprep.subr.mxu0 0.0
        %2340 = vmatpush1.msra.mxu0 0.0
        %2341 = vmatprep.subr.mxu0 0.0
        %2342 = vmatpush1.msra.mxu0 0.0
        %2343 = vmatprep.subr.mxu0 0.0
        %2344 = vmatpush1.msra.mxu0 0.0
        %2345 = vmatprep.subr.mxu0 0.0
        %2346 = vmatpush1.msra.mxu0 0.0
        %2347 = vmatprep.subr.mxu0 0.0
        %2348 = vmatpush1.msra.mxu0 0.0
        %2349 = vmatprep.subr.mxu0 0.0
        %2350 = vmatpush1.msra.mxu0 0.0
        %2351 = vmatprep.subr.mxu0 0.0
        %2352 = vmatpush1.msra.mxu0 0.0
        %2353 = vmatprep.mubr.f32.mxu0 0.0
        %v2354 = vand.u32 %v1541, 4294901760
        %2355 = vmatmul.mubr.f32.gmra.mrb[0].mxu0 %v2354
        %v2356 = vpop.f32.mrb[0].mxu0
        %v2357 = vadd.f32 %v2236, %v2356
        %v2358 = vpop.f32.mrb[0].mxu0
        %2359 = vmatprep.mubr.f32.mxu0 0.0
        %v2360 = vand.u32 %v1544, 4294901760
        %2361 = vmatmul.mubr.f32.gmra.mrb[0].mxu0 %v2360
        %v2362 = vpop.f32.mrb[0].mxu0
        %v2363 = vadd.f32 %v2242, %v2362
        %v2364 = vpop.f32.mrb[0].mxu0
        %2365 = vmatprep.mubr.f32.mxu0 0.0
        %v2366 = vand.u32 %v1547, 4294901760
        %2367 = vmatmul.mubr.f32.gmra.mrb[0].mxu0 %v2366
        %v2368 = vpop.f32.mrb[0].mxu0
        %v2369 = vadd.f32 %v2248, %v2368
        %v2370 = vpop.f32.mrb[0].mxu0
        %2371 = vmatprep.mubr.f32.mxu0 0.0
        %v2372 = vand.u32 %v1550, 4294901760
        %2373 = vmatmul.mubr.f32.gmra.mrb[0].mxu0 %v2372
        %v2374 = vpop.f32.mrb[0].mxu0
        %v2375 = vadd.f32 %v2254, %v2374
        %v2376 = vpop.f32.mrb[0].mxu0
        %2377 = vmatprep.mubr.f32.mxu0 0.0
        %v2378 = vand.u32 %v1553, 4294901760
        %2379 = vmatmul.mubr.f32.gmra.mrb[0].mxu0 %v2378
        %v2380 = vpop.f32.mrb[0].mxu0
        %v2381 = vadd.f32 %v2260, %v2380
        %v2382 = vpop.f32.mrb[0].mxu0
        %2383 = vmatprep.mubr.f32.mxu0 0.0
        %v2384 = vand.u32 %v1556, 4294901760
        %2385 = vmatmul.mubr.f32.gmra.mrb[0].mxu0 %v2384
        %v2386 = vpop.f32.mrb[0].mxu0
        %v2387 = vadd.f32 %v2266, %v2386
        %v2388 = vpop.f32.mrb[0].mxu0
        %2389 = vmatprep.mubr.f32.mxu0 0.0
        %v2390 = vand.u32 %v1559, 4294901760
        %2391 = vmatmul.mubr.f32.gmra.mrb[0].mxu0 %v2390
        %v2392 = vpop.f32.mrb[0].mxu0
        %v2393 = vadd.f32 %v2272, %v2392
        %v2394 = vpop.f32.mrb[0].mxu0
        %2395 = vmatprep.mubr.f32.mxu0 0.0
        %v2396 = vand.u32 %v1562, 4294901760
        %2397 = vmatmul.mubr.f32.gmra.mrb[0].mxu0 %v2396
        %v2398 = vpop.f32.mrb[0].mxu0
        %v2399 = vadd.f32 %v2278, %v2398
        %v2400 = vpop.f32.mrb[0].mxu0
        %2401 = vdwg.mxu0
        %v2402 = vtanh.pop %v2357
        %v2403 = vtanh.pop %v2363
        %v2404 = vtanh.pop %v2369
        %v2405 = vtanh.pop %v2375
        %v2406 = vtanh.pop %v2381
        %v2407 = vtanh.pop %v2387
        %v2408 = vtanh.pop %v2393
        %v2409 = vtanh.pop %v2399
        %v2410 = vld [vmem:[%s7] sm:$0xff]
        %v2411 = vld [vmem:[%s8] sm:$0xff]
        %2413 = vset.pattern.permute.xlu0 0
        %2414 = vperm.xlu0 %2413, %v2411
        %v2415 = vpop.permute.xlu0 %2414
        %v2418 = vsel %vm613, %v2410, 0
        %2420 = vmatprep.subr.mxu0 0.0
        %v2421 = vand.u32 %v2402, 4294901760
        %2422 = vmatpush1.msra.mxu0 %v2421
        %2423 = vmatprep.subr.mxu0 0.0
        %v2424 = vand.u32 %v2403, 4294901760
        %2425 = vmatpush1.msra.mxu0 %v2424
        %2426 = vmatprep.subr.mxu0 0.0
        %v2427 = vand.u32 %v2404, 4294901760
        %2428 = vmatpush1.msra.mxu0 %v2427
        %2429 = vmatprep.subr.mxu0 0.0
        %v2430 = vand.u32 %v2405, 4294901760
        %2431 = vmatpush1.msra.mxu0 %v2430
        %2432 = vmatprep.subr.mxu0 0.0
        %v2433 = vand.u32 %v2406, 4294901760
        %2434 = vmatpush1.msra.mxu0 %v2433
        %2435 = vmatprep.subr.mxu0 0.0
        %v2436 = vand.u32 %v2407, 4294901760
        %2437 = vmatpush1.msra.mxu0 %v2436
        %2438 = vmatprep.subr.mxu0 0.0
        %v2439 = vand.u32 %v2408, 4294901760
        %2440 = vmatpush1.msra.mxu0 %v2439
        %2441 = vmatprep.subr.mxu0 0.0
        %v2442 = vand.u32 %v2409, 4294901760
        %2443 = vmatpush1.msra.mxu0 %v2442
        %2444 = vmatprep.subr.mxu0 0.0
        %2445 = vmatpush1.msra.mxu0 0.0
        %2446 = vmatprep.subr.mxu0 0.0
        %2447 = vmatpush1.msra.mxu0 0.0
        %2448 = vmatprep.subr.mxu0 0.0
        %2449 = vmatpush1.msra.mxu0 0.0
        %2450 = vmatprep.subr.mxu0 0.0
        %2451 = vmatpush1.msra.mxu0 0.0
        %2452 = vmatprep.subr.mxu0 0.0
        %2453 = vmatpush1.msra.mxu0 0.0
        %2454 = vmatprep.subr.mxu0 0.0
        %2455 = vmatpush1.msra.mxu0 0.0
        %2456 = vmatprep.subr.mxu0 0.0
        %2457 = vmatpush1.msra.mxu0 0.0
        %2458 = vmatprep.subr.mxu0 0.0
        %2459 = vmatpush1.msra.mxu0 0.0
        %2460 = vmatprep.subr.mxu0 0.0
        %2461 = vmatpush1.msra.mxu0 0.0
        %2462 = vmatprep.subr.mxu0 0.0
        %2463 = vmatpush1.msra.mxu0 0.0
        %2464 = vmatprep.subr.mxu0 0.0
        %2465 = vmatpush1.msra.mxu0 0.0
        %2466 = vmatprep.subr.mxu0 0.0
        %2467 = vmatpush1.msra.mxu0 0.0
        %2468 = vmatprep.subr.mxu0 0.0
        %2469 = vmatpush1.msra.mxu0 0.0
        %2470 = vmatprep.subr.mxu0 0.0
        %2471 = vmatpush1.msra.mxu0 0.0
        %2472 = vmatprep.subr.mxu0 0.0
        %2473 = vmatpush1.msra.mxu0 0.0
        %2474 = vmatprep.subr.mxu0 0.0
        %2475 = vmatpush1.msra.mxu0 0.0
        %2476 = vmatprep.subr.mxu0 0.0
        %2477 = vmatpush1.msra.mxu0 0.0
        %2478 = vmatprep.subr.mxu0 0.0
        %2479 = vmatpush1.msra.mxu0 0.0
        %2480 = vmatprep.subr.mxu0 0.0
        %2481 = vmatpush1.msra.mxu0 0.0
        %2482 = vmatprep.subr.mxu0 0.0
        %2483 = vmatpush1.msra.mxu0 0.0
        %2484 = vmatprep.subr.mxu0 0.0
        %2485 = vmatpush1.msra.mxu0 0.0
        %2486 = vmatprep.subr.mxu0 0.0
        %2487 = vmatpush1.msra.mxu0 0.0
        %2488 = vmatprep.subr.mxu0 0.0
        %2489 = vmatpush1.msra.mxu0 0.0
        %2490 = vmatprep.subr.mxu0 0.0
        %2491 = vmatpush1.msra.mxu0 0.0
        %2492 = vmatprep.mubr.f32.mxu0 0.0
        %v2493 = vand.u32 %v2418, 4294901760
        %v2494 = vsub.f32 %v2418, %v2493
        %v2495 = vand.u32 %v2494, 4294901760
        %v2496 = vsub.f32 %v2494, %v2495
        %v2497 = vand.u32 %v2496, 4294901760
        %2498 = vmatmul.mubr.f32.gmra.mrb[0].mxu0 %v2497
        %v2499 = vpop.f32.mrb[0].mxu0
        %v2500 = vadd.f32 %v2415, %v2499
        %v2501 = vpop.f32.mrb[0].mxu0
        %2502 = vdwg.mxu0
        %2503 = vmatprep.subr.mxu0 0.0
        %v2504 = vand.u32 %v2402, 4294901760
        %v2505 = vsub.f32 %v2402, %v2504
        %v2506 = vand.u32 %v2505, 4294901760
        %v2507 = vsub.f32 %v2505, %v2506
        %v2508 = vand.u32 %v2507, 4294901760
        %2509 = vmatpush1.msra.mxu0 %v2508
        %2510 = vmatprep.subr.mxu0 0.0
        %v2511 = vand.u32 %v2403, 4294901760
        %v2512 = vsub.f32 %v2403, %v2511
        %v2513 = vand.u32 %v2512, 4294901760
        %v2514 = vsub.f32 %v2512, %v2513
        %v2515 = vand.u32 %v2514, 4294901760
        %2516 = vmatpush1.msra.mxu0 %v2515
        %2517 = vmatprep.subr.mxu0 0.0
        %v2518 = vand.u32 %v2404, 4294901760
        %v2519 = vsub.f32 %v2404, %v2518
        %v2520 = vand.u32 %v2519, 4294901760
        %v2521 = vsub.f32 %v2519, %v2520
        %v2522 = vand.u32 %v2521, 4294901760
        %2523 = vmatpush1.msra.mxu0 %v2522
        %2524 = vmatprep.subr.mxu0 0.0
        %v2525 = vand.u32 %v2405, 4294901760
        %v2526 = vsub.f32 %v2405, %v2525
        %v2527 = vand.u32 %v2526, 4294901760
        %v2528 = vsub.f32 %v2526, %v2527
        %v2529 = vand.u32 %v2528, 4294901760
        %2530 = vmatpush1.msra.mxu0 %v2529
        %2531 = vmatprep.subr.mxu0 0.0
        %v2532 = vand.u32 %v2406, 4294901760
        %v2533 = vsub.f32 %v2406, %v2532
        %v2534 = vand.u32 %v2533, 4294901760
        %v2535 = vsub.f32 %v2533, %v2534
        %v2536 = vand.u32 %v2535, 4294901760
        %2537 = vmatpush1.msra.mxu0 %v2536
        %2538 = vmatprep.subr.mxu0 0.0
        %v2539 = vand.u32 %v2407, 4294901760
        %v2540 = vsub.f32 %v2407, %v2539
        %v2541 = vand.u32 %v2540, 4294901760
        %v2542 = vsub.f32 %v2540, %v2541
        %v2543 = vand.u32 %v2542, 4294901760
        %2544 = vmatpush1.msra.mxu0 %v2543
        %2545 = vmatprep.subr.mxu0 0.0
        %v2546 = vand.u32 %v2408, 4294901760
        %v2547 = vsub.f32 %v2408, %v2546
        %v2548 = vand.u32 %v2547, 4294901760
        %v2549 = vsub.f32 %v2547, %v2548
        %v2550 = vand.u32 %v2549, 4294901760
        %2551 = vmatpush1.msra.mxu0 %v2550
        %2552 = vmatprep.subr.mxu0 0.0
        %v2553 = vand.u32 %v2409, 4294901760
        %v2554 = vsub.f32 %v2409, %v2553
        %v2555 = vand.u32 %v2554, 4294901760
        %v2556 = vsub.f32 %v2554, %v2555
        %v2557 = vand.u32 %v2556, 4294901760
        %2558 = vmatpush1.msra.mxu0 %v2557
        %2559 = vmatprep.subr.mxu0 0.0
        %2560 = vmatpush1.msra.mxu0 0.0
        %2561 = vmatprep.subr.mxu0 0.0
        %2562 = vmatpush1.msra.mxu0 0.0
        %2563 = vmatprep.subr.mxu0 0.0
        %2564 = vmatpush1.msra.mxu0 0.0
        %2565 = vmatprep.subr.mxu0 0.0
        %2566 = vmatpush1.msra.mxu0 0.0
        %2567 = vmatprep.subr.mxu0 0.0
        %2568 = vmatpush1.msra.mxu0 0.0
        %2569 = vmatprep.subr.mxu0 0.0
        %2570 = vmatpush1.msra.mxu0 0.0
        %2571 = vmatprep.subr.mxu0 0.0
        %2572 = vmatpush1.msra.mxu0 0.0
        %2573 = vmatprep.subr.mxu0 0.0
        %2574 = vmatpush1.msra.mxu0 0.0
        %2575 = vmatprep.subr.mxu0 0.0
        %2576 = vmatpush1.msra.mxu0 0.0
        %2577 = vmatprep.subr.mxu0 0.0
        %2578 = vmatpush1.msra.mxu0 0.0
        %2579 = vmatprep.subr.mxu0 0.0
        %2580 = vmatpush1.msra.mxu0 0.0
        %2581 = vmatprep.subr.mxu0 0.0
        %2582 = vmatpush1.msra.mxu0 0.0
        %2583 = vmatprep.subr.mxu0 0.0
        %2584 = vmatpush1.msra.mxu0 0.0
        %2585 = vmatprep.subr.mxu0 0.0
        %2586 = vmatpush1.msra.mxu0 0.0
        %2587 = vmatprep.subr.mxu0 0.0
        %2588 = vmatpush1.msra.mxu0 0.0
        %2589 = vmatprep.subr.mxu0 0.0
        %2590 = vmatpush1.msra.mxu0 0.0
        %2591 = vmatprep.subr.mxu0 0.0
        %2592 = vmatpush1.msra.mxu0 0.0
        %2593 = vmatprep.subr.mxu0 0.0
        %2594 = vmatpush1.msra.mxu0 0.0
        %2595 = vmatprep.subr.mxu0 0.0
        %2596 = vmatpush1.msra.mxu0 0.0
        %2597 = vmatprep.subr.mxu0 0.0
        %2598 = vmatpush1.msra.mxu0 0.0
        %2599 = vmatprep.subr.mxu0 0.0
        %2600 = vmatpush1.msra.mxu0 0.0
        %2601 = vmatprep.subr.mxu0 0.0
        %2602 = vmatpush1.msra.mxu0 0.0
        %2603 = vmatprep.subr.mxu0 0.0
        %2604 = vmatpush1.msra.mxu0 0.0
        %2605 = vmatprep.subr.mxu0 0.0
        %2606 = vmatpush1.msra.mxu0 0.0
        %2607 = vmatprep.mubr.f32.mxu0 0.0
        %v2608 = vand.u32 %v2418, 4294901760
        %2609 = vmatmul.mubr.f32.gmra.mrb[0].mxu0 %v2608
        %v2610 = vpop.f32.mrb[0].mxu0
        %v2611 = vadd.f32 %v2500, %v2610
        %v2612 = vpop.f32.mrb[0].mxu0
        %2613 = vdwg.mxu0
        %2614 = vmatprep.subr.mxu0 0.0
        %v2615 = vand.u32 %v2402, 4294901760
        %v2616 = vsub.f32 %v2402, %v2615
        %2617 = vmatpush1.msra.mxu0 %v2616
        %2618 = vmatprep.subr.mxu0 0.0
        %v2619 = vand.u32 %v2403, 4294901760
        %v2620 = vsub.f32 %v2403, %v2619
        %2621 = vmatpush1.msra.mxu0 %v2620
        %2622 = vmatprep.subr.mxu0 0.0
        %v2623 = vand.u32 %v2404, 4294901760
        %v2624 = vsub.f32 %v2404, %v2623
        %2625 = vmatpush1.msra.mxu0 %v2624
        %2626 = vmatprep.subr.mxu0 0.0
        %v2627 = vand.u32 %v2405, 4294901760
        %v2628 = vsub.f32 %v2405, %v2627
        %2629 = vmatpush1.msra.mxu0 %v2628
        %2630 = vmatprep.subr.mxu0 0.0
        %v2631 = vand.u32 %v2406, 4294901760
        %v2632 = vsub.f32 %v2406, %v2631
        %2633 = vmatpush1.msra.mxu0 %v2632
        %2634 = vmatprep.subr.mxu0 0.0
        %v2635 = vand.u32 %v2407, 4294901760
        %v2636 = vsub.f32 %v2407, %v2635
        %2637 = vmatpush1.msra.mxu0 %v2636
        %2638 = vmatprep.subr.mxu0 0.0
        %v2639 = vand.u32 %v2408, 4294901760
        %v2640 = vsub.f32 %v2408, %v2639
        %2641 = vmatpush1.msra.mxu0 %v2640
        %2642 = vmatprep.subr.mxu0 0.0
        %v2643 = vand.u32 %v2409, 4294901760
        %v2644 = vsub.f32 %v2409, %v2643
        %2645 = vmatpush1.msra.mxu0 %v2644
        %2646 = vmatprep.subr.mxu0 0.0
        %2647 = vmatpush1.msra.mxu0 0.0
        %2648 = vmatprep.subr.mxu0 0.0
        %2649 = vmatpush1.msra.mxu0 0.0
        %2650 = vmatprep.subr.mxu0 0.0
        %2651 = vmatpush1.msra.mxu0 0.0
        %2652 = vmatprep.subr.mxu0 0.0
        %2653 = vmatpush1.msra.mxu0 0.0
        %2654 = vmatprep.subr.mxu0 0.0
        %2655 = vmatpush1.msra.mxu0 0.0
        %2656 = vmatprep.subr.mxu0 0.0
        %2657 = vmatpush1.msra.mxu0 0.0
        %2658 = vmatprep.subr.mxu0 0.0
        %2659 = vmatpush1.msra.mxu0 0.0
        %2660 = vmatprep.subr.mxu0 0.0
        %2661 = vmatpush1.msra.mxu0 0.0
        %2662 = vmatprep.subr.mxu0 0.0
        %2663 = vmatpush1.msra.mxu0 0.0
        %2664 = vmatprep.subr.mxu0 0.0
        %2665 = vmatpush1.msra.mxu0 0.0
        %2666 = vmatprep.subr.mxu0 0.0
        %2667 = vmatpush1.msra.mxu0 0.0
        %2668 = vmatprep.subr.mxu0 0.0
        %2669 = vmatpush1.msra.mxu0 0.0
        %2670 = vmatprep.subr.mxu0 0.0
        %2671 = vmatpush1.msra.mxu0 0.0
        %2672 = vmatprep.subr.mxu0 0.0
        %2673 = vmatpush1.msra.mxu0 0.0
        %2674 = vmatprep.subr.mxu0 0.0
        %2675 = vmatpush1.msra.mxu0 0.0
        %2676 = vmatprep.subr.mxu0 0.0
        %2677 = vmatpush1.msra.mxu0 0.0
        %2678 = vmatprep.subr.mxu0 0.0
        %2679 = vmatpush1.msra.mxu0 0.0
        %2680 = vmatprep.subr.mxu0 0.0
        %2681 = vmatpush1.msra.mxu0 0.0
        %2682 = vmatprep.subr.mxu0 0.0
        %2683 = vmatpush1.msra.mxu0 0.0
        %2684 = vmatprep.subr.mxu0 0.0
        %2685 = vmatpush1.msra.mxu0 0.0
        %2686 = vmatprep.subr.mxu0 0.0
        %2687 = vmatpush1.msra.mxu0 0.0
        %2688 = vmatprep.subr.mxu0 0.0
        %2689 = vmatpush1.msra.mxu0 0.0
        %2690 = vmatprep.subr.mxu0 0.0
        %2691 = vmatpush1.msra.mxu0 0.0
        %2692 = vmatprep.subr.mxu0 0.0
        %2693 = vmatpush1.msra.mxu0 0.0
        %2694 = vmatprep.mubr.f32.mxu0 0.0
        %v2695 = vand.u32 %v2418, 4294901760
        %v2696 = vsub.f32 %v2418, %v2695
        %2697 = vmatmul.mubr.f32.gmra.mrb[0].mxu0 %v2696
        %v2698 = vpop.f32.mrb[0].mxu0
        %v2699 = vadd.f32 %v2611, %v2698
        %v2700 = vpop.f32.mrb[0].mxu0
        %2701 = vdwg.mxu0
        %2702 = vmatprep.subr.mxu0 0.0
        %v2703 = vand.u32 %v2402, 4294901760
        %2704 = vmatpush1.msra.mxu0 %v2703
        %2705 = vmatprep.subr.mxu0 0.0
        %v2706 = vand.u32 %v2403, 4294901760
        %2707 = vmatpush1.msra.mxu0 %v2706
        %2708 = vmatprep.subr.mxu0 0.0
        %v2709 = vand.u32 %v2404, 4294901760
        %2710 = vmatpush1.msra.mxu0 %v2709
        %2711 = vmatprep.subr.mxu0 0.0
        %v2712 = vand.u32 %v2405, 4294901760
        %2713 = vmatpush1.msra.mxu0 %v2712
        %2714 = vmatprep.subr.mxu0 0.0
        %v2715 = vand.u32 %v2406, 4294901760
        %2716 = vmatpush1.msra.mxu0 %v2715
        %2717 = vmatprep.subr.mxu0 0.0
        %v2718 = vand.u32 %v2407, 4294901760
        %2719 = vmatpush1.msra.mxu0 %v2718
        %2720 = vmatprep.subr.mxu0 0.0
        %v2721 = vand.u32 %v2408, 4294901760
        %2722 = vmatpush1.msra.mxu0 %v2721
        %2723 = vmatprep.subr.mxu0 0.0
        %v2724 = vand.u32 %v2409, 4294901760
        %2725 = vmatpush1.msra.mxu0 %v2724
        %2726 = vmatprep.subr.mxu0 0.0
        %2727 = vmatpush1.msra.mxu0 0.0
        %2728 = vmatprep.subr.mxu0 0.0
        %2729 = vmatpush1.msra.mxu0 0.0
        %2730 = vmatprep.subr.mxu0 0.0
        %2731 = vmatpush1.msra.mxu0 0.0
        %2732 = vmatprep.subr.mxu0 0.0
        %2733 = vmatpush1.msra.mxu0 0.0
        %2734 = vmatprep.subr.mxu0 0.0
        %2735 = vmatpush1.msra.mxu0 0.0
        %2736 = vmatprep.subr.mxu0 0.0
        %2737 = vmatpush1.msra.mxu0 0.0
        %2738 = vmatprep.subr.mxu0 0.0
        %2739 = vmatpush1.msra.mxu0 0.0
        %2740 = vmatprep.subr.mxu0 0.0
        %2741 = vmatpush1.msra.mxu0 0.0
        %2742 = vmatprep.subr.mxu0 0.0
        %2743 = vmatpush1.msra.mxu0 0.0
        %2744 = vmatprep.subr.mxu0 0.0
        %2745 = vmatpush1.msra.mxu0 0.0
        %2746 = vmatprep.subr.mxu0 0.0
        %2747 = vmatpush1.msra.mxu0 0.0
        %2748 = vmatprep.subr.mxu0 0.0
        %2749 = vmatpush1.msra.mxu0 0.0
        %2750 = vmatprep.subr.mxu0 0.0
        %2751 = vmatpush1.msra.mxu0 0.0
        %2752 = vmatprep.subr.mxu0 0.0
        %2753 = vmatpush1.msra.mxu0 0.0
        %2754 = vmatprep.subr.mxu0 0.0
        %2755 = vmatpush1.msra.mxu0 0.0
        %2756 = vmatprep.subr.mxu0 0.0
        %2757 = vmatpush1.msra.mxu0 0.0
        %2758 = vmatprep.subr.mxu0 0.0
        %2759 = vmatpush1.msra.mxu0 0.0
        %2760 = vmatprep.subr.mxu0 0.0
        %2761 = vmatpush1.msra.mxu0 0.0
        %2762 = vmatprep.subr.mxu0 0.0
        %2763 = vmatpush1.msra.mxu0 0.0
        %2764 = vmatprep.subr.mxu0 0.0
        %2765 = vmatpush1.msra.mxu0 0.0
        %2766 = vmatprep.subr.mxu0 0.0
        %2767 = vmatpush1.msra.mxu0 0.0
        %2768 = vmatprep.subr.mxu0 0.0
        %2769 = vmatpush1.msra.mxu0 0.0
        %2770 = vmatprep.subr.mxu0 0.0
        %2771 = vmatpush1.msra.mxu0 0.0
        %2772 = vmatprep.subr.mxu0 0.0
        %2773 = vmatpush1.msra.mxu0 0.0
        %2774 = vmatprep.mubr.f32.mxu0 0.0
        %v2775 = vand.u32 %v2418, 4294901760
        %v2776 = vsub.f32 %v2418, %v2775
        %v2777 = vand.u32 %v2776, 4294901760
        %2778 = vmatmul.mubr.f32.gmra.mrb[0].mxu0 %v2777
        %v2779 = vpop.f32.mrb[0].mxu0
        %v2780 = vadd.f32 %v2699, %v2779
        %v2781 = vpop.f32.mrb[0].mxu0
        %2782 = vdwg.mxu0
        %2783 = vmatprep.subr.mxu0 0.0
        %v2784 = vand.u32 %v2402, 4294901760
        %v2785 = vsub.f32 %v2402, %v2784
        %v2786 = vand.u32 %v2785, 4294901760
        %2787 = vmatpush1.msra.mxu0 %v2786
        %2788 = vmatprep.subr.mxu0 0.0
        %v2789 = vand.u32 %v2403, 4294901760
        %v2790 = vsub.f32 %v2403, %v2789
        %v2791 = vand.u32 %v2790, 4294901760
        %2792 = vmatpush1.msra.mxu0 %v2791
        %2793 = vmatprep.subr.mxu0 0.0
        %v2794 = vand.u32 %v2404, 4294901760
        %v2795 = vsub.f32 %v2404, %v2794
        %v2796 = vand.u32 %v2795, 4294901760
        %2797 = vmatpush1.msra.mxu0 %v2796
        %2798 = vmatprep.subr.mxu0 0.0
        %v2799 = vand.u32 %v2405, 4294901760
        %v2800 = vsub.f32 %v2405, %v2799
        %v2801 = vand.u32 %v2800, 4294901760
        %2802 = vmatpush1.msra.mxu0 %v2801
        %2803 = vmatprep.subr.mxu0 0.0
        %v2804 = vand.u32 %v2406, 4294901760
        %v2805 = vsub.f32 %v2406, %v2804
        %v2806 = vand.u32 %v2805, 4294901760
        %2807 = vmatpush1.msra.mxu0 %v2806
        %2808 = vmatprep.subr.mxu0 0.0
        %v2809 = vand.u32 %v2407, 4294901760
        %v2810 = vsub.f32 %v2407, %v2809
        %v2811 = vand.u32 %v2810, 4294901760
        %2812 = vmatpush1.msra.mxu0 %v2811
        %2813 = vmatprep.subr.mxu0 0.0
        %v2814 = vand.u32 %v2408, 4294901760
        %v2815 = vsub.f32 %v2408, %v2814
        %v2816 = vand.u32 %v2815, 4294901760
        %2817 = vmatpush1.msra.mxu0 %v2816
        %2818 = vmatprep.subr.mxu0 0.0
        %v2819 = vand.u32 %v2409, 4294901760
        %v2820 = vsub.f32 %v2409, %v2819
        %v2821 = vand.u32 %v2820, 4294901760
        %2822 = vmatpush1.msra.mxu0 %v2821
        %2823 = vmatprep.subr.mxu0 0.0
        %2824 = vmatpush1.msra.mxu0 0.0
        %2825 = vmatprep.subr.mxu0 0.0
        %2826 = vmatpush1.msra.mxu0 0.0
        %2827 = vmatprep.subr.mxu0 0.0
        %2828 = vmatpush1.msra.mxu0 0.0
        %2829 = vmatprep.subr.mxu0 0.0
        %2830 = vmatpush1.msra.mxu0 0.0
        %2831 = vmatprep.subr.mxu0 0.0
        %2832 = vmatpush1.msra.mxu0 0.0
        %2833 = vmatprep.subr.mxu0 0.0
        %2834 = vmatpush1.msra.mxu0 0.0
        %2835 = vmatprep.subr.mxu0 0.0
        %2836 = vmatpush1.msra.mxu0 0.0
        %2837 = vmatprep.subr.mxu0 0.0
        %2838 = vmatpush1.msra.mxu0 0.0
        %2839 = vmatprep.subr.mxu0 0.0
        %2840 = vmatpush1.msra.mxu0 0.0
        %2841 = vmatprep.subr.mxu0 0.0
        %2842 = vmatpush1.msra.mxu0 0.0
        %2843 = vmatprep.subr.mxu0 0.0
        %2844 = vmatpush1.msra.mxu0 0.0
        %2845 = vmatprep.subr.mxu0 0.0
        %2846 = vmatpush1.msra.mxu0 0.0
        %2847 = vmatprep.subr.mxu0 0.0
        %2848 = vmatpush1.msra.mxu0 0.0
        %2849 = vmatprep.subr.mxu0 0.0
        %2850 = vmatpush1.msra.mxu0 0.0
        %2851 = vmatprep.subr.mxu0 0.0
        %2852 = vmatpush1.msra.mxu0 0.0
        %2853 = vmatprep.subr.mxu0 0.0
        %2854 = vmatpush1.msra.mxu0 0.0
        %2855 = vmatprep.subr.mxu0 0.0
        %2856 = vmatpush1.msra.mxu0 0.0
        %2857 = vmatprep.subr.mxu0 0.0
        %2858 = vmatpush1.msra.mxu0 0.0
        %2859 = vmatprep.subr.mxu0 0.0
        %2860 = vmatpush1.msra.mxu0 0.0
        %2861 = vmatprep.subr.mxu0 0.0
        %2862 = vmatpush1.msra.mxu0 0.0
        %2863 = vmatprep.subr.mxu0 0.0
        %2864 = vmatpush1.msra.mxu0 0.0
        %2865 = vmatprep.subr.mxu0 0.0
        %2866 = vmatpush1.msra.mxu0 0.0
        %2867 = vmatprep.subr.mxu0 0.0
        %2868 = vmatpush1.msra.mxu0 0.0
        %2869 = vmatprep.subr.mxu0 0.0
        %2870 = vmatpush1.msra.mxu0 0.0
        %2871 = vmatprep.mubr.f32.mxu0 0.0
        %v2872 = vand.u32 %v2418, 4294901760
        %2873 = vmatmul.mubr.f32.gmra.mrb[0].mxu0 %v2872
        %v2874 = vpop.f32.mrb[0].mxu0
        %v2875 = vadd.f32 %v2780, %v2874
        %v2876 = vpop.f32.mrb[0].mxu0
        %2877 = vdwg.mxu0
        %2878 = vmatprep.subr.mxu0 0.0
        %v2879 = vand.u32 %v2402, 4294901760
        %2880 = vmatpush1.msra.mxu0 %v2879
        %2881 = vmatprep.subr.mxu0 0.0
        %v2882 = vand.u32 %v2403, 4294901760
        %2883 = vmatpush1.msra.mxu0 %v2882
        %2884 = vmatprep.subr.mxu0 0.0
        %v2885 = vand.u32 %v2404, 4294901760
        %2886 = vmatpush1.msra.mxu0 %v2885
        %2887 = vmatprep.subr.mxu0 0.0
        %v2888 = vand.u32 %v2405, 4294901760
        %2889 = vmatpush1.msra.mxu0 %v2888
        %2890 = vmatprep.subr.mxu0 0.0
        %v2891 = vand.u32 %v2406, 4294901760
        %2892 = vmatpush1.msra.mxu0 %v2891
        %2893 = vmatprep.subr.mxu0 0.0
        %v2894 = vand.u32 %v2407, 4294901760
        %2895 = vmatpush1.msra.mxu0 %v2894
        %2896 = vmatprep.subr.mxu0 0.0
        %v2897 = vand.u32 %v2408, 4294901760
        %2898 = vmatpush1.msra.mxu0 %v2897
        %2899 = vmatprep.subr.mxu0 0.0
        %v2900 = vand.u32 %v2409, 4294901760
        %2901 = vmatpush1.msra.mxu0 %v2900
        %2902 = vmatprep.subr.mxu0 0.0
        %2903 = vmatpush1.msra.mxu0 0.0
        %2904 = vmatprep.subr.mxu0 0.0
        %2905 = vmatpush1.msra.mxu0 0.0
        %2906 = vmatprep.subr.mxu0 0.0
        %2907 = vmatpush1.msra.mxu0 0.0
        %2908 = vmatprep.subr.mxu0 0.0
        %2909 = vmatpush1.msra.mxu0 0.0
        %2910 = vmatprep.subr.mxu0 0.0
        %2911 = vmatpush1.msra.mxu0 0.0
        %2912 = vmatprep.subr.mxu0 0.0
        %2913 = vmatpush1.msra.mxu0 0.0
        %2914 = vmatprep.subr.mxu0 0.0
        %2915 = vmatpush1.msra.mxu0 0.0
        %2916 = vmatprep.subr.mxu0 0.0
        %2917 = vmatpush1.msra.mxu0 0.0
        %2918 = vmatprep.subr.mxu0 0.0
        %2919 = vmatpush1.msra.mxu0 0.0
        %2920 = vmatprep.subr.mxu0 0.0
        %2921 = vmatpush1.msra.mxu0 0.0
        %2922 = vmatprep.subr.mxu0 0.0
        %2923 = vmatpush1.msra.mxu0 0.0
        %2924 = vmatprep.subr.mxu0 0.0
        %2925 = vmatpush1.msra.mxu0 0.0
        %2926 = vmatprep.subr.mxu0 0.0
        %2927 = vmatpush1.msra.mxu0 0.0
        %2928 = vmatprep.subr.mxu0 0.0
        %2929 = vmatpush1.msra.mxu0 0.0
        %2930 = vmatprep.subr.mxu0 0.0
        %2931 = vmatpush1.msra.mxu0 0.0
        %2932 = vmatprep.subr.mxu0 0.0
        %2933 = vmatpush1.msra.mxu0 0.0
        %2934 = vmatprep.subr.mxu0 0.0
        %2935 = vmatpush1.msra.mxu0 0.0
        %2936 = vmatprep.subr.mxu0 0.0
        %2937 = vmatpush1.msra.mxu0 0.0
        %2938 = vmatprep.subr.mxu0 0.0
        %2939 = vmatpush1.msra.mxu0 0.0
        %2940 = vmatprep.subr.mxu0 0.0
        %2941 = vmatpush1.msra.mxu0 0.0
        %2942 = vmatprep.subr.mxu0 0.0
        %2943 = vmatpush1.msra.mxu0 0.0
        %2944 = vmatprep.subr.mxu0 0.0
        %2945 = vmatpush1.msra.mxu0 0.0
        %2946 = vmatprep.subr.mxu0 0.0
        %2947 = vmatpush1.msra.mxu0 0.0
        %2948 = vmatprep.subr.mxu0 0.0
        %2949 = vmatpush1.msra.mxu0 0.0
        %2950 = vmatprep.mubr.f32.mxu0 0.0
        %v2951 = vand.u32 %v2418, 4294901760
        %2952 = vmatmul.mubr.f32.gmra.mrb[0].mxu0 %v2951
        %v2953 = vpop.f32.mrb[0].mxu0
        %v2954 = vadd.f32 %v2875, %v2953
        %v2955 = vpop.f32.mrb[0].mxu0
        %2956 = vdwg.mxu0
        %2957 = vst [vmem:[%s323] sm:$0xff] %v2954
        %s2958 = sand.u32 %s225, 1
        %s2959 = scalar_lea.sflag [#allocation3], %s2958
        %s2960 = sand.u32 %s225, 1
        %s2961 = smul.addr %s2960, 8
        %s2962 = scalar_lea.vmem [#allocation2], %s2961
        // Predicated region
        $region57: #{tpu_custom_call.1} parent=55 // pred_check
          %p2963 = pneg %p235
        $region58: #{tpu_custom_call.1} parent=55 // pred_check_branch
          %2965 = sbr.rel (%p2963) target = $region60
        $region59: #{tpu_custom_call.1} parent=55 // pred_region
          %s2967 = ssub.s32 128, 128
          %2968 = vsyncadd %s2959, %s2967
          %s2969 = smul.addr %s23, 128
          %s2970 = scalar_lea.hbm %s9, %s2969
          %s2972 = sshll.u32 %s2962, 4
          %s2973 = int_to_ptr.vmem [resolvable:$true] %s2972
          %2975 = dma.vmem_to_hbm [thread:$0]  %s2973, 128, %s2970, %s2959
        $region60: #{tpu_custom_call.1} parent=55 // pred_fallthru
          _
      $region56: #{tpu_custom_call.1} parent=5 // pred_fallthru
        _
      %p2976 = scmp.le.s32.totalorder 2, %s18
      // Predicated region
      $region61: #{tpu_custom_call.1} parent=5 // pred_check
        %p2977 = pneg %p2976
      $region62: #{tpu_custom_call.1} parent=5 // pred_check_branch
        %2979 = sbr.rel (%p2977) target = $region64
      $region63: #{tpu_custom_call.1} parent=5 // pred_region
        %s2980 = ssub.s32 %s18, 2
        // Predicated region
        $region65: #{tpu_custom_call.1} parent=63 // pred_check
          %p2981 = pneg %p241
        $region66: #{tpu_custom_call.1} parent=63 // pred_check_branch
          %2983 = sbr.rel (%p2981) target = $region68
        $region67: #{tpu_custom_call.1} parent=63 // pred_region
          %s2984 = sand.u32 %s226, 1
          %s2985 = scalar_lea.sflag [#allocation3], %s2984
          %s2986 = sand.u32 %s226, 1
          %s2987 = smul.addr %s2986, 8
          %s2988 = scalar_lea.vmem [#allocation2], %s2987
          %2989 = dma.done %s2985, 128
        $region68: #{tpu_custom_call.1} parent=63 // pred_fallthru
          _
      $region64: #{tpu_custom_call.1} parent=5 // pred_fallthru
        _
    $region6: #{tpu_custom_call.1} parent=1 // loop_footer
      %s22 = sadd.s32 1, %s18
    $region7: #{tpu_custom_call.1} parent=1 // loop_footer_branch
      %17 = sbr.rel target = $region3
    $region8: #{tpu_custom_call.1} parent=1 // loop_exit
      _
    %2990 = vsyncpa [#allocation3], 1
    %s2991 = scalar_lea.sflag [#allocation3], 1
    %2992 = vsyncpa %s2991, 1

</llo_original>
